<compile_context>
chip_gen: v6e
topology: v6e:2x2x1
jax: 0.10.0
libtpu: 0.0.40
codegen_flags: <defaults>
</compile_context>

<pallas_src>
import functools

import jax
import jax.numpy as jnp
import numpy as np
from jax import lax
from jax.experimental import pallas as pl
from jax.experimental.pallas import tpu as pltpu

# ----------------------------- config ---------------------------------------
B = 2              # batch
S = 8              # sequence length
H = 32             # hidden_size
NH = 4             # num_attention_heads
NKV = 2            # num_key_value_heads
HD = 8             # head_dim
N_REP = NH // NKV
BS = B * S                     # 16 : batch and sequence folded into one row axis
DQ = NH * HD                   # 32
DKV = NKV * HD                 # 16
DQK = DQ + DKV                 # 48 : fused q|k slab width
WCOLS = DQ + 2 * DKV           # 64 : fused [q | k | v] weight slab width
HALF = HD // 2
SCALING = HD ** -0.5
ROPE_BASE = 10000.0
NEG_INF = -1e9

assert S & (S - 1) == 0, "in-kernel mask uses shift/and; S must be a power of 2"
S_SHIFT = S.bit_length() - 1   # log2(S)
S_MASK = S - 1


# ----------------------------- fused kernel ----------------------------------
def fused_attention_kernel(x_ref, w_qkv_ref, wo_t_ref, rope_ref, *refs,
                           output_attentions):
    """Single grid step: QKV proj + RoPE + GQA causal attention + o_proj for
    all B*S rows at once (batch separation handled by a block-diagonal mask)."""
    if output_attentions:
        out_ref, w_ref, ctx_ref = refs
    else:
        out_ref, ctx_ref = refs
        w_ref = None

    x = x_ref[...]                                                    # (BS, H)

    # One lane-dense matmul -> [q * scaling | k | v]  (scaling folded offline).
    qkv = jnp.dot(x, w_qkv_ref[...],
                  preferred_element_type=jnp.float32)                 # (BS, WCOLS)
    qk = qkv[:, :DQK]                                                 # (BS, DQK)
    v = qkv[:, DQK:]                                                  # (BS, DKV)

    # RoPE without weight duplication: rotate_half == per-head half swap.
    #   roll(-HALF)[j] = qk[j+HALF]  (used where within-head pos <  HALF, coeff -sin)
    #   roll(+HALF)[j] = qk[j-HALF]  (used where within-head pos >= HALF, coeff +sin)
    # Half selection and the +/- sign are folded into the precomputed slabs, so
    # any cross-head wraparound lanes are multiplied by exactly 0.
    rope = rope_ref[...]                                              # (BS, 3*DQK)
    cos_s = rope[:, :DQK]
    sin_lo = rope[:, DQK:2 * DQK]     # -sin on first half of each head, 0 elsewhere
    sin_hi = rope[:, 2 * DQK:]        # +sin on second half of each head, 0 elsewhere
    qk_next = jnp.roll(qk, -HALF, axis=1)
    qk_prev = jnp.roll(qk, HALF, axis=1)
    qk_roped = qk * cos_s + qk_next * sin_lo + qk_prev * sin_hi
    q = qk_roped[:, :DQ]                                              # (BS, DQ)
    k = qk_roped[:, DQ:]                                              # (BS, DKV)

    # Block-diagonal causal mask over the folded (batch*seq) row axis,
    # generated in-kernel (no HBM mask stream).
    row = lax.broadcasted_iota(jnp.int32, (BS, BS), 0)
    col = lax.broadcasted_iota(jnp.int32, (BS, BS), 1)
    same_batch = (row >> S_SHIFT) == (col >> S_SHIFT)
    causal = (col & S_MASK) <= (row & S_MASK)
    mask_add = jnp.where(same_batch & causal,
                         jnp.float32(0.0), jnp.float32(NEG_INF))

    for h in range(NH):               # unrolled at trace time; no grid overhead
        g = h // N_REP                # GQA: shared K/V head (repeat_kv never materialized)
        qh = q[:, h * HD:(h + 1) * HD]                                # (BS, HD)
        kh = k[:, g * HD:(g + 1) * HD]                                # (BS, HD)
        vh = v[:, g * HD:(g + 1) * HD]                                # (BS, HD)

        # Scores for BOTH batches at once; cross-batch entries get -1e9 and
        # exp-underflow to exactly 0, so softmax and p@v remain per-batch.
        s = lax.dot_general(qh, kh, (((1,), (1,)), ((), ())),
                            preferred_element_type=jnp.float32)       # (BS, BS)
        s = s + mask_add
        s = s - jnp.max(s, axis=-1, keepdims=True)
        p = jnp.exp(s)
        # approx=True would push this onto the otherwise-idle EUP slot; exact
        # kept for fp32 parity with the eager reference.
        inv_denom = pl.reciprocal(jnp.sum(p, axis=-1, keepdims=True),
                                  approx=False)

        if output_attentions:
            p = p * inv_denom
            w_ref[:, h * BS:(h + 1) * BS] = p          # lane-dense packed weights
            ctx_ref[:, h * HD:(h + 1) * HD] = jnp.dot(
                p, vh, preferred_element_type=jnp.float32)
        else:
            # Normalize the (BS, HD) context instead of the (BS, BS) probs.
            ctx_ref[:, h * HD:(h + 1) * HD] = jnp.dot(
                p, vh, preferred_element_type=jnp.float32) * inv_denom

    # o_proj straight from the VMEM context scratch (no concatenate).
    out_ref[...] = jnp.dot(ctx_ref[...], wo_t_ref[...],
                           preferred_element_type=jnp.float32)        # (BS, H)


# ----------------------------- offline preprocessing --------------------------
def prepare_params(params):
    """One-time offline weight prep: fuse Wq/Wk/Wv (nn.Linear stores (out,in))
    into a single lane-dense (H, WCOLS) slab with the attention scaling folded
    into the q columns, and pre-transpose Wo so no per-call transposes remain.
    For v6e/v7x, casting these slabs to bfloat16 halves the weight DMA (MXU is
    bf16-native) at the cost of the 1e-4 fp32 parity checked below."""
    wq, wk, wv, wo = params["wq"], params["wk"], params["wv"], params["wo"]
    w_qkv = jnp.concatenate([wq.T * SCALING, wk.T, wv.T], axis=1)     # (H, WCOLS)
    return {"w_qkv": w_qkv, "wo_t": wo.T}                             # wo_t: (DQ, H)


def prepare_rope(cos, sin):
    """One-time prep of the merged rope slab (BS, 3*DQK) =
    [cos | -sin*first_half | +sin*second_half], tiled per (q|k) head and per
    batch so in-kernel RoPE is just 2 lane rolls + 3 muls + 2 adds."""
    first_half = jnp.concatenate(
        [jnp.ones((1, HALF), jnp.float32), jnp.zeros((1, HALF), jnp.float32)],
        axis=1)                                                       # (1, HD)
    second_half = 1.0 - first_half
    n_heads_qk = NH + NKV
    cos_qk = jnp.tile(cos, (1, n_heads_qk))                           # (S, DQK)
    sin_lo = jnp.tile(-sin * first_half, (1, n_heads_qk))             # (S, DQK)
    sin_hi = jnp.tile(sin * second_half, (1, n_heads_qk))             # (S, DQK)
    slab = jnp.concatenate([cos_qk, sin_lo, sin_hi], axis=1)          # (S, 3*DQK)
    return jnp.tile(slab, (B, 1))                                     # (BS, 3*DQK): row = b*S + s


# ----------------------------- wrapper ---------------------------------------
@functools.partial(jax.jit, static_argnames=("output_attentions",))
def llama_attention_pallas(hidden_states, rope_slab, prepared,
                           output_attentions=True):
    """hidden_states: (B,S,H).  Returns (attn_output (B,S,H),
    attn_weights (B,NH,S,S) or None)."""
    x2d = hidden_states.reshape(BS, H)

    out_shape = [jax.ShapeDtypeStruct((BS, H), jnp.float32)]
    out_specs = [pl.BlockSpec((BS, H), lambda i: (0, 0))]
    if output_attentions:
        out_shape.append(jax.ShapeDtypeStruct((BS, NH * BS), jnp.float32))
        out_specs.append(pl.BlockSpec((BS, NH * BS), lambda i: (0, 0)))

    results = pl.pallas_call(
        functools.partial(fused_attention_kernel,
                          output_attentions=output_attentions),
        out_shape=tuple(out_shape),
        grid=(1,),                       # whole problem in one step; fits VMEM easily
        in_specs=[
            pl.BlockSpec((BS, H), lambda i: (0, 0)),          # hidden (B*S, H)
            pl.BlockSpec((H, WCOLS), lambda i: (0, 0)),       # fused [Wq*s | Wk | Wv]
            pl.BlockSpec((DQ, H), lambda i: (0, 0)),          # Wo^T
            pl.BlockSpec((BS, 3 * DQK), lambda i: (0, 0)),    # merged rope slab
        ],
        out_specs=tuple(out_specs),
        scratch_shapes=[pltpu.VMEM((BS, DQ), jnp.float32)],   # per-head ctx slab
        compiler_params=pltpu.CompilerParams(
            dimension_semantics=("arbitrary",)),
    )(x2d, prepared["w_qkv"], prepared["wo_t"], rope_slab)

    out = results[0].reshape(B, S, H)
    if not output_attentions:
        return out, None

    packed = results[1]                                       # (BS, NH*BS)
    pw = packed.reshape(B, S, NH, B, S)
    # Pick the matching key-batch block for each query batch (cross-batch blocks
    # are exact zeros), then reorder to (B, NH, S, S).  Tiny wrapper-side XLA.
    attn_w = jnp.stack([pw[b, :, :, b, :] for b in range(B)], axis=0)
    attn_w = attn_w.transpose(0, 2, 1, 3)
    return out, attn_w


# ----------------------------- pure-JAX reference -----------------------------
def rotate_half_ref(x):
    x1 = x[..., : x.shape[-1] // 2]
    x2 = x[..., x.shape[-1] // 2:]
    return jnp.concatenate([-x2, x1], axis=-1)


def reference_forward(hidden_states, cos, sin, params):
    wq, wk, wv, wo = params["wq"], params["wk"], params["wv"], params["wo"]
    q = (hidden_states @ wq.T).reshape(B, S, NH, HD).transpose(0, 2, 1, 3)
    k = (hidden_states @ wk.T).reshape(B, S, NKV, HD).transpose(0, 2, 1, 3)
    v = (hidden_states @ wv.T).reshape(B, S, NKV, HD).transpose(0, 2, 1, 3)
    c = cos[None, None]
    s = sin[None, None]
    q = q * c + rotate_half_ref(q) * s
    k = k * c + rotate_half_ref(k) * s
    k = jnp.repeat(k, N_REP, axis=1)
    v = jnp.repeat(v, N_REP, axis=1)
    causal = jnp.tril(jnp.ones((S, S), dtype=bool))
    mask = jnp.where(causal, 0.0, NEG_INF).astype(jnp.float32)[None, None]
    scores = jnp.einsum("bhqd,bhkd->bhqk", q, k) * SCALING + mask
    w = jax.nn.softmax(scores.astype(jnp.float32), axis=-1)
    o = jnp.einsum("bhqk,bhkd->bhqd", w, v)
    o = o.transpose(0, 2, 1, 3).reshape(B, S, NH * HD)
    return o @ wo.T, w


# ----------------------------- main -------------------------------------------
if __name__ == "__main__":
    key = jax.random.PRNGKey(0)
    k_x, k_q, k_k, k_v, k_o = jax.random.split(key, 5)

    hidden_states = jax.random.normal(k_x, (B, S, H), dtype=jnp.float32)
    params = {
        "wq": jax.random.normal(k_q, (NH * HD, H), dtype=jnp.float32) * 0.05,
        "wk": jax.random.normal(k_k, (NKV * HD, H), dtype=jnp.float32) * 0.05,
        "wv": jax.random.normal(k_v, (NKV * HD, H), dtype=jnp.float32) * 0.05,
        "wo": jax.random.normal(k_o, (H, NH * HD), dtype=jnp.float32) * 0.05,
    }

    # rotary embeddings (HF LlamaRotaryEmbedding semantics)
    inv_freq = 1.0 / (ROPE_BASE ** (jnp.arange(0, HD, 2, dtype=jnp.float32) / HD))
    pos = jnp.arange(S, dtype=jnp.float32)
    freqs = pos[:, None] * inv_freq[None, :]             # (S, HD/2)
    emb = jnp.concatenate([freqs, freqs], axis=-1)       # (S, HD)
    cos = jnp.cos(emb)
    sin = jnp.sin(emb)

    prepared = prepare_params(params)                    # one-time weight prep
    rope_slab = prepare_rope(cos, sin)                   # one-time rope-slab prep

    out, attn_w = llama_attention_pallas(hidden_states, rope_slab, prepared,
                                         output_attentions=True)
    out = jax.block_until_ready(out)
    attn_w = jax.block_until_ready(attn_w)

    ref_out, ref_w = reference_forward(hidden_states, cos, sin, params)

    np.testing.assert_allclose(np.asarray(out), np.asarray(ref_out),
                               rtol=1e-4, atol=1e-4)
    np.testing.assert_allclose(np.asarray(attn_w), np.asarray(ref_w),
                               rtol=1e-4, atol=1e-4)

    # No-weights fast path (skips the (B,NH,S,S) HBM stream; flash-compatible).
    out2, none_w = llama_attention_pallas(hidden_states, rope_slab, prepared,
                                          output_attentions=False)
    out2 = jax.block_until_ready(out2)
    assert none_w is None
    np.testing.assert_allclose(np.asarray(out2), np.asarray(ref_out),
                               rtol=1e-4, atol=1e-4)

    print("KERNEL_OK")
</pallas_src>

<mosaic_0001>
module attributes {stable_mosaic.version = 11 : i64} {
  func.func @fused_attention_kernel(%arg0: i32, %arg1: memref<16x32xf32, #tpu.memory_space<vmem>>, %arg2: memref<32x64xf32, #tpu.memory_space<vmem>>, %arg3: memref<32x32xf32, #tpu.memory_space<vmem>>, %arg4: memref<16x144xf32, #tpu.memory_space<vmem>>, %arg5: memref<16x32xf32, #tpu.memory_space<vmem>>, %arg6: memref<16x64xf32, #tpu.memory_space<vmem>>, %arg7: memref<16x32xf32, #tpu.memory_space<vmem>>) attributes {dimension_semantics = [#tpu.dimension_semantics<arbitrary>], iteration_bounds = array<i64: 1>, scalar_prefetch = 0 : i64, scratch_operands = 1 : i64, tpu.core_type = #tpu.core_type<tc>, window_params = [{pipeline_mode = #tpu.pipeline_mode<synchronous>, transform_indices = @transform_0, window_bounds = array<i64: 16, 32>}, {pipeline_mode = #tpu.pipeline_mode<synchronous>, transform_indices = @transform_1, window_bounds = array<i64: 32, 64>}, {pipeline_mode = #tpu.pipeline_mode<synchronous>, transform_indices = @transform_2, window_bounds = array<i64: 32, 32>}, {pipeline_mode = #tpu.pipeline_mode<synchronous>, transform_indices = @transform_3, window_bounds = array<i64: 16, 144>}, {pipeline_mode = #tpu.pipeline_mode<synchronous>, transform_indices = @transform_4, window_bounds = array<i64: 16, 32>}, {pipeline_mode = #tpu.pipeline_mode<synchronous>, transform_indices = @transform_5, window_bounds = array<i64: 16, 64>}]} {
    %c0 = arith.constant 0 : index
    %c0_0 = arith.constant 0 : index
    %0 = vector.load %arg1[%c0, %c0_0] : memref<16x32xf32, #tpu.memory_space<vmem>>, vector<16x32xf32>
    %c0_1 = arith.constant 0 : index
    %c0_2 = arith.constant 0 : index
    %1 = vector.load %arg2[%c0_1, %c0_2] : memref<32x64xf32, #tpu.memory_space<vmem>>, vector<32x64xf32>
    %cst = arith.constant dense<0.000000e+00> : vector<16x64xf32>
    %2 = tpu.matmul %0, %1, %cst {dimension_numbers = #tpu.dot_dimension_numbers<[1], [0], [0], [1], [0, 0, 1, 1], [], []>} : vector<16x32xf32>, vector<32x64xf32>, vector<16x64xf32> -> vector<16x64xf32>
    %3 = vector.extract_strided_slice %2 {offsets = [0, 0], sizes = [16, 48], strides = [1, 1]} : vector<16x64xf32> to vector<16x48xf32>
    %4 = vector.extract_strided_slice %2 {offsets = [0, 48], sizes = [16, 16], strides = [1, 1]} : vector<16x64xf32> to vector<16x16xf32>
    %c0_3 = arith.constant 0 : index
    %c0_4 = arith.constant 0 : index
    %5 = vector.load %arg4[%c0_3, %c0_4] : memref<16x144xf32, #tpu.memory_space<vmem>>, vector<16x144xf32>
    %6 = vector.extract_strided_slice %5 {offsets = [0, 0], sizes = [16, 48], strides = [1, 1]} : vector<16x144xf32> to vector<16x48xf32>
    %7 = vector.extract_strided_slice %5 {offsets = [0, 48], sizes = [16, 48], strides = [1, 1]} : vector<16x144xf32> to vector<16x48xf32>
    %8 = vector.extract_strided_slice %5 {offsets = [0, 96], sizes = [16, 48], strides = [1, 1]} : vector<16x144xf32> to vector<16x48xf32>
    %9 = vector.extract_strided_slice %3 {offsets = [0, 4], sizes = [16, 44], strides = [1, 1]} : vector<16x48xf32> to vector<16x44xf32>
    %10 = vector.extract_strided_slice %3 {offsets = [0, 0], sizes = [16, 4], strides = [1, 1]} : vector<16x48xf32> to vector<16x4xf32>
    %11 = tpu.concatenate %9, %10 in 1 : vector<16x44xf32>, vector<16x4xf32> -> vector<16x48xf32>
    %12 = vector.extract_strided_slice %3 {offsets = [0, 44], sizes = [16, 4], strides = [1, 1]} : vector<16x48xf32> to vector<16x4xf32>
    %13 = vector.extract_strided_slice %3 {offsets = [0, 0], sizes = [16, 44], strides = [1, 1]} : vector<16x48xf32> to vector<16x44xf32>
    %14 = tpu.concatenate %12, %13 in 1 : vector<16x4xf32>, vector<16x44xf32> -> vector<16x48xf32>
    %15 = arith.mulf %3, %6 : vector<16x48xf32>
    %16 = arith.mulf %11, %7 : vector<16x48xf32>
    %17 = arith.addf %15, %16 : vector<16x48xf32>
    %18 = arith.mulf %14, %8 : vector<16x48xf32>
    %19 = arith.addf %17, %18 : vector<16x48xf32>
    %20 = vector.extract_strided_slice %19 {offsets = [0, 0], sizes = [16, 32], strides = [1, 1]} : vector<16x48xf32> to vector<16x32xf32>
    %21 = vector.extract_strided_slice %19 {offsets = [0, 32], sizes = [16, 16], strides = [1, 1]} : vector<16x48xf32> to vector<16x16xf32>
    %22 = tpu.iota {dimensions = array<i32: 0>} : vector<16x16xi32>
    %23 = tpu.iota {dimensions = array<i32: 1>} : vector<16x16xi32>
    %c3_i32 = arith.constant 3 : i32
    %24 = vector.broadcast %c3_i32 : i32 to vector<16x16xi32>
    %25 = arith.shrsi %22, %24 : vector<16x16xi32>
    %c3_i32_5 = arith.constant 3 : i32
    %26 = vector.broadcast %c3_i32_5 : i32 to vector<16x16xi32>
    %27 = arith.shrsi %23, %26 : vector<16x16xi32>
    %28 = arith.cmpi eq, %25, %27 : vector<16x16xi32>
    %c7_i32 = arith.constant 7 : i32
    %29 = vector.broadcast %c7_i32 : i32 to vector<16x16xi32>
    %30 = arith.andi %23, %29 : vector<16x16xi32>
    %c7_i32_6 = arith.constant 7 : i32
    %31 = vector.broadcast %c7_i32_6 : i32 to vector<16x16xi32>
    %32 = arith.andi %22, %31 : vector<16x16xi32>
    %33 = arith.cmpi sle, %30, %32 : vector<16x16xi32>
    %34 = arith.andi %28, %33 : vector<16x16xi1>
    %cst_7 = arith.constant 0.000000e+00 : f32
    %cst_8 = arith.constant -1.000000e+09 : f32
    %35 = vector.broadcast %cst_7 : f32 to vector<16x16xf32>
    %36 = vector.broadcast %cst_8 : f32 to vector<16x16xf32>
    %37 = arith.select %34, %35, %36 : vector<16x16xi1>, vector<16x16xf32>
    %38 = vector.extract_strided_slice %20 {offsets = [0, 0], sizes = [16, 8], strides = [1, 1]} : vector<16x32xf32> to vector<16x8xf32>
    %39 = vector.extract_strided_slice %21 {offsets = [0, 0], sizes = [16, 8], strides = [1, 1]} : vector<16x16xf32> to vector<16x8xf32>
    %40 = vector.extract_strided_slice %4 {offsets = [0, 0], sizes = [16, 8], strides = [1, 1]} : vector<16x16xf32> to vector<16x8xf32>
    %cst_9 = arith.constant dense<0.000000e+00> : vector<16x16xf32>
    %41 = tpu.matmul %38, %39, %cst_9 {dimension_numbers = #tpu.dot_dimension_numbers<[1], [1], [0], [0], [0, 0, 1, 0], [], []>} : vector<16x8xf32>, vector<16x8xf32>, vector<16x16xf32> -> vector<16x16xf32>
    %42 = arith.addf %41, %37 : vector<16x16xf32>
    %cst_10 = arith.constant dense<0xFF800000> : vector<16xf32>
    %43 = vector.multi_reduction <maximumf>, %42, %cst_10 [1] : vector<16x16xf32> to vector<16xf32>
    %44 = vector.shape_cast %43 : vector<16xf32> to vector<16x1xf32>
    %45 = vector.broadcast %44 : vector<16x1xf32> to vector<16x16xf32>
    %46 = arith.subf %42, %45 : vector<16x16xf32>
    %47 = math.exp %46 : vector<16x16xf32>
    %cst_11 = arith.constant dense<0.000000e+00> : vector<16xf32>
    %48 = vector.multi_reduction <add>, %47, %cst_11 [1] : vector<16x16xf32> to vector<16xf32>
    %49 = vector.shape_cast %48 : vector<16xf32> to vector<16x1xf32>
    %50 = tpu.reciprocal %49 : vector<16x1xf32> -> vector<16x1xf32>
    %51 = vector.broadcast %50 : vector<16x1xf32> to vector<16x16xf32>
    %52 = arith.mulf %47, %51 : vector<16x16xf32>
    %c0_12 = arith.constant 0 : index
    %c0_13 = arith.constant 0 : index
    %53 = vector.load %arg6[%c0_12, %c0_13] : memref<16x64xf32, #tpu.memory_space<vmem>>, vector<16x16xf32>
    tpu.vector_store %arg6[%c0_12, %c0_13], %52 {strides = array<i32>} : memref<16x64xf32, #tpu.memory_space<vmem>>, vector<16x16xf32>,
    %cst_14 = arith.constant dense<0.000000e+00> : vector<16x8xf32>
    %54 = tpu.matmul %52, %40, %cst_14 {dimension_numbers = #tpu.dot_dimension_numbers<[1], [0], [0], [1], [0, 0, 1, 1], [], []>} : vector<16x16xf32>, vector<16x8xf32>, vector<16x8xf32> -> vector<16x8xf32>
    %c0_15 = arith.constant 0 : index
    %c0_16 = arith.constant 0 : index
    %55 = vector.load %arg7[%c0_15, %c0_16] : memref<16x32xf32, #tpu.memory_space<vmem>>, vector<16x8xf32>
    tpu.vector_store %arg7[%c0_15, %c0_16], %54 {strides = array<i32>} : memref<16x32xf32, #tpu.memory_space<vmem>>, vector<16x8xf32>,
    %56 = vector.extract_strided_slice %20 {offsets = [0, 8], sizes = [16, 8], strides = [1, 1]} : vector<16x32xf32> to vector<16x8xf32>
    %57 = vector.extract_strided_slice %21 {offsets = [0, 0], sizes = [16, 8], strides = [1, 1]} : vector<16x16xf32> to vector<16x8xf32>
    %58 = vector.extract_strided_slice %4 {offsets = [0, 0], sizes = [16, 8], strides = [1, 1]} : vector<16x16xf32> to vector<16x8xf32>
    %cst_17 = arith.constant dense<0.000000e+00> : vector<16x16xf32>
    %59 = tpu.matmul %56, %57, %cst_17 {dimension_numbers = #tpu.dot_dimension_numbers<[1], [1], [0], [0], [0, 0, 1, 0], [], []>} : vector<16x8xf32>, vector<16x8xf32>, vector<16x16xf32> -> vector<16x16xf32>
    %60 = arith.addf %59, %37 : vector<16x16xf32>
    %cst_18 = arith.constant dense<0xFF800000> : vector<16xf32>
    %61 = vector.multi_reduction <maximumf>, %60, %cst_18 [1] : vector<16x16xf32> to vector<16xf32>
    %62 = vector.shape_cast %61 : vector<16xf32> to vector<16x1xf32>
    %63 = vector.broadcast %62 : vector<16x1xf32> to vector<16x16xf32>
    %64 = arith.subf %60, %63 : vector<16x16xf32>
    %65 = math.exp %64 : vector<16x16xf32>
    %cst_19 = arith.constant dense<0.000000e+00> : vector<16xf32>
    %66 = vector.multi_reduction <add>, %65, %cst_19 [1] : vector<16x16xf32> to vector<16xf32>
    %67 = vector.shape_cast %66 : vector<16xf32> to vector<16x1xf32>
    %68 = tpu.reciprocal %67 : vector<16x1xf32> -> vector<16x1xf32>
    %69 = vector.broadcast %68 : vector<16x1xf32> to vector<16x16xf32>
    %70 = arith.mulf %65, %69 : vector<16x16xf32>
    %c0_20 = arith.constant 0 : index
    %c16 = arith.constant 16 : index
    %71 = vector.load %arg6[%c0_20, %c16] : memref<16x64xf32, #tpu.memory_space<vmem>>, vector<16x16xf32>
    tpu.vector_store %arg6[%c0_20, %c16], %70 {strides = array<i32>} : memref<16x64xf32, #tpu.memory_space<vmem>>, vector<16x16xf32>,
    %cst_21 = arith.constant dense<0.000000e+00> : vector<16x8xf32>
    %72 = tpu.matmul %70, %58, %cst_21 {dimension_numbers = #tpu.dot_dimension_numbers<[1], [0], [0], [1], [0, 0, 1, 1], [], []>} : vector<16x16xf32>, vector<16x8xf32>, vector<16x8xf32> -> vector<16x8xf32>
    %c0_22 = arith.constant 0 : index
    %c8 = arith.constant 8 : index
    %73 = vector.load %arg7[%c0_22, %c8] : memref<16x32xf32, #tpu.memory_space<vmem>>, vector<16x8xf32>
    tpu.vector_store %arg7[%c0_22, %c8], %72 {strides = array<i32>} : memref<16x32xf32, #tpu.memory_space<vmem>>, vector<16x8xf32>,
    %74 = vector.extract_strided_slice %20 {offsets = [0, 16], sizes = [16, 8], strides = [1, 1]} : vector<16x32xf32> to vector<16x8xf32>
    %75 = vector.extract_strided_slice %21 {offsets = [0, 8], sizes = [16, 8], strides = [1, 1]} : vector<16x16xf32> to vector<16x8xf32>
    %76 = vector.extract_strided_slice %4 {offsets = [0, 8], sizes = [16, 8], strides = [1, 1]} : vector<16x16xf32> to vector<16x8xf32>
    %cst_23 = arith.constant dense<0.000000e+00> : vector<16x16xf32>
    %77 = tpu.matmul %74, %75, %cst_23 {dimension_numbers = #tpu.dot_dimension_numbers<[1], [1], [0], [0], [0, 0, 1, 0], [], []>} : vector<16x8xf32>, vector<16x8xf32>, vector<16x16xf32> -> vector<16x16xf32>
    %78 = arith.addf %77, %37 : vector<16x16xf32>
    %cst_24 = arith.constant dense<0xFF800000> : vector<16xf32>
    %79 = vector.multi_reduction <maximumf>, %78, %cst_24 [1] : vector<16x16xf32> to vector<16xf32>
    %80 = vector.shape_cast %79 : vector<16xf32> to vector<16x1xf32>
    %81 = vector.broadcast %80 : vector<16x1xf32> to vector<16x16xf32>
    %82 = arith.subf %78, %81 : vector<16x16xf32>
    %83 = math.exp %82 : vector<16x16xf32>
    %cst_25 = arith.constant dense<0.000000e+00> : vector<16xf32>
    %84 = vector.multi_reduction <add>, %83, %cst_25 [1] : vector<16x16xf32> to vector<16xf32>
    %85 = vector.shape_cast %84 : vector<16xf32> to vector<16x1xf32>
    %86 = tpu.reciprocal %85 : vector<16x1xf32> -> vector<16x1xf32>
    %87 = vector.broadcast %86 : vector<16x1xf32> to vector<16x16xf32>
    %88 = arith.mulf %83, %87 : vector<16x16xf32>
    %c0_26 = arith.constant 0 : index
    %c32 = arith.constant 32 : index
    %89 = vector.load %arg6[%c0_26, %c32] : memref<16x64xf32, #tpu.memory_space<vmem>>, vector<16x16xf32>
    tpu.vector_store %arg6[%c0_26, %c32], %88 {strides = array<i32>} : memref<16x64xf32, #tpu.memory_space<vmem>>, vector<16x16xf32>,
    %cst_27 = arith.constant dense<0.000000e+00> : vector<16x8xf32>
    %90 = tpu.matmul %88, %76, %cst_27 {dimension_numbers = #tpu.dot_dimension_numbers<[1], [0], [0], [1], [0, 0, 1, 1], [], []>} : vector<16x16xf32>, vector<16x8xf32>, vector<16x8xf32> -> vector<16x8xf32>
    %c0_28 = arith.constant 0 : index
    %c16_29 = arith.constant 16 : index
    %91 = vector.load %arg7[%c0_28, %c16_29] : memref<16x32xf32, #tpu.memory_space<vmem>>, vector<16x8xf32>
    tpu.vector_store %arg7[%c0_28, %c16_29], %90 {strides = array<i32>} : memref<16x32xf32, #tpu.memory_space<vmem>>, vector<16x8xf32>,
    %92 = vector.extract_strided_slice %20 {offsets = [0, 24], sizes = [16, 8], strides = [1, 1]} : vector<16x32xf32> to vector<16x8xf32>
    %93 = vector.extract_strided_slice %21 {offsets = [0, 8], sizes = [16, 8], strides = [1, 1]} : vector<16x16xf32> to vector<16x8xf32>
    %94 = vector.extract_strided_slice %4 {offsets = [0, 8], sizes = [16, 8], strides = [1, 1]} : vector<16x16xf32> to vector<16x8xf32>
    %cst_30 = arith.constant dense<0.000000e+00> : vector<16x16xf32>
    %95 = tpu.matmul %92, %93, %cst_30 {dimension_numbers = #tpu.dot_dimension_numbers<[1], [1], [0], [0], [0, 0, 1, 0], [], []>} : vector<16x8xf32>, vector<16x8xf32>, vector<16x16xf32> -> vector<16x16xf32>
    %96 = arith.addf %95, %37 : vector<16x16xf32>
    %cst_31 = arith.constant dense<0xFF800000> : vector<16xf32>
    %97 = vector.multi_reduction <maximumf>, %96, %cst_31 [1] : vector<16x16xf32> to vector<16xf32>
    %98 = vector.shape_cast %97 : vector<16xf32> to vector<16x1xf32>
    %99 = vector.broadcast %98 : vector<16x1xf32> to vector<16x16xf32>
    %100 = arith.subf %96, %99 : vector<16x16xf32>
    %101 = math.exp %100 : vector<16x16xf32>
    %cst_32 = arith.constant dense<0.000000e+00> : vector<16xf32>
    %102 = vector.multi_reduction <add>, %101, %cst_32 [1] : vector<16x16xf32> to vector<16xf32>
    %103 = vector.shape_cast %102 : vector<16xf32> to vector<16x1xf32>
    %104 = tpu.reciprocal %103 : vector<16x1xf32> -> vector<16x1xf32>
    %105 = vector.broadcast %104 : vector<16x1xf32> to vector<16x16xf32>
    %106 = arith.mulf %101, %105 : vector<16x16xf32>
    %c0_33 = arith.constant 0 : index
    %c48 = arith.constant 48 : index
    %107 = vector.load %arg6[%c0_33, %c48] : memref<16x64xf32, #tpu.memory_space<vmem>>, vector<16x16xf32>
    tpu.vector_store %arg6[%c0_33, %c48], %106 {strides = array<i32>} : memref<16x64xf32, #tpu.memory_space<vmem>>, vector<16x16xf32>,
    %cst_34 = arith.constant dense<0.000000e+00> : vector<16x8xf32>
    %108 = tpu.matmul %106, %94, %cst_34 {dimension_numbers = #tpu.dot_dimension_numbers<[1], [0], [0], [1], [0, 0, 1, 1], [], []>} : vector<16x16xf32>, vector<16x8xf32>, vector<16x8xf32> -> vector<16x8xf32>
    %c0_35 = arith.constant 0 : index
    %c24 = arith.constant 24 : index
    %109 = vector.load %arg7[%c0_35, %c24] : memref<16x32xf32, #tpu.memory_space<vmem>>, vector<16x8xf32>
    tpu.vector_store %arg7[%c0_35, %c24], %108 {strides = array<i32>} : memref<16x32xf32, #tpu.memory_space<vmem>>, vector<16x8xf32>,
    %c0_36 = arith.constant 0 : index
    %c0_37 = arith.constant 0 : index
    %110 = vector.load %arg7[%c0_36, %c0_37] : memref<16x32xf32, #tpu.memory_space<vmem>>, vector<16x32xf32>
    %c0_38 = arith.constant 0 : index
    %c0_39 = arith.constant 0 : index
    %111 = vector.load %arg3[%c0_38, %c0_39] : memref<32x32xf32, #tpu.memory_space<vmem>>, vector<32x32xf32>
    %cst_40 = arith.constant dense<0.000000e+00> : vector<16x32xf32>
    %112 = tpu.matmul %110, %111, %cst_40 {dimension_numbers = #tpu.dot_dimension_numbers<[1], [0], [0], [1], [0, 0, 1, 1], [], []>} : vector<16x32xf32>, vector<32x32xf32>, vector<16x32xf32> -> vector<16x32xf32>
    %c0_41 = arith.constant 0 : index
    %c0_42 = arith.constant 0 : index
    %113 = vector.load %arg5[%c0_41, %c0_42] : memref<16x32xf32, #tpu.memory_space<vmem>>, vector<16x32xf32>
    tpu.vector_store %arg5[%c0_41, %c0_42], %112 {strides = array<i32>} : memref<16x32xf32, #tpu.memory_space<vmem>>, vector<16x32xf32>,
    return
  }
  func.func @transform_0(%arg0: i32) -> (i32, i32) {
    %c0_i32 = arith.constant 0 : i32
    %c0_i32_0 = arith.constant 0 : i32
    %c0_i32_1 = arith.constant 0 : i32
    return %c0_i32, %c0_i32_0 : i32, i32
  }
  func.func @transform_1(%arg0: i32) -> (i32, i32) {
    %c0_i32 = arith.constant 0 : i32
    %c0_i32_0 = arith.constant 0 : i32
    %c0_i32_1 = arith.constant 0 : i32
    return %c0_i32, %c0_i32_0 : i32, i32
  }
  func.func @transform_2(%arg0: i32) -> (i32, i32) {
    %c0_i32 = arith.constant 0 : i32
    %c0_i32_0 = arith.constant 0 : i32
    %c0_i32_1 = arith.constant 0 : i32
    return %c0_i32, %c0_i32_0 : i32, i32
  }
  func.func @transform_3(%arg0: i32) -> (i32, i32) {
    %c0_i32 = arith.constant 0 : i32
    %c0_i32_0 = arith.constant 0 : i32
    %c0_i32_1 = arith.constant 0 : i32
    return %c0_i32, %c0_i32_0 : i32, i32
  }
  func.func @transform_4(%arg0: i32) -> (i32, i32) {
    %c0_i32 = arith.constant 0 : i32
    %c0_i32_0 = arith.constant 0 : i32
    %c0_i32_1 = arith.constant 0 : i32
    return %c0_i32, %c0_i32_0 : i32, i32
  }
  func.func @transform_5(%arg0: i32) -> (i32, i32) {
    %c0_i32 = arith.constant 0 : i32
    %c0_i32_0 = arith.constant 0 : i32
    %c0_i32_1 = arith.constant 0 : i32
    return %c0_i32, %c0_i32_0 : i32, i32
  }
}

</mosaic_0001>

<llo_original>
// kernel: llama_attention_pallas.1
$region0: #{llama_attention_pallas.1}
  #allocation0 [shape = 'u32[]', space=smem, size = 0x4, offset = 0x4, fixed_abs, tag = 'smem constant byte address 0x4 - core index']
  #allocation1 [shape = 'u32[144,128]{1,0:T(1,128)}', space=vmem, size = 0x12000, scoped, tag = 'internal scratch']
  #allocation2 [shape = 'f32[16,32]{1,0:T(8,128)}', space=vmem, size = 0x2000, scoped, tag = 'scratch operand']
  %s0 = inlined_call_operand.hbm [shape: f32[16,32], index: 0, kind: input, shape index: {}]
  %s1 = inlined_call_operand.hbm [shape: f32[32,64], index: 1, kind: input, shape index: {}]
  %s2 = inlined_call_operand.hbm [shape: f32[32,32], index: 2, kind: input, shape index: {}]
  %s3 = inlined_call_operand.hbm [shape: f32[16,144], index: 3, kind: input, shape index: {}]
  %s4 = inlined_call_operand.hbm [shape: f32[16,32], index: 4, kind: output, shape index: {0}]
  %s5 = inlined_call_operand.vmem [shape: f32[16,64], index: 5, kind: output, shape index: {1}]
  %6 = xla_tuple %s4, %s5
  %s7 = sld [smem:[#allocation0]]
  $region50: #{llama_attention_pallas.1} parent=0
    _
  %s9 = ssub.s32 1, %s7
  %s10 = scalar_select 0, %s9, %s7
  $region1: #{llama_attention_pallas.1} parent=0
    #allocation3 [shape = 'u8[8192]{0}', space=vmem, size = 0x2000, scoped, tag = 'input window, operand 0, single buffered']
    #allocation4 [shape = 's32[1]{0}', space=sflag, size = 0x4, scoped, tag = 'scoped memory for llama_attention_pallas.1']
    #allocation5 [shape = 's32[1]{0}', space=sflag, size = 0x4, scoped, tag = 'scoped memory for llama_attention_pallas.1']
    #allocation6 [shape = 'u8[16384]{0}', space=vmem, size = 0x4000, scoped, tag = 'input window, operand 1, single buffered']
    #allocation7 [shape = 's32[1]{0}', space=sflag, size = 0x4, scoped, tag = 'scoped memory for llama_attention_pallas.1']
    #allocation8 [shape = 'u8[16384]{0}', space=vmem, size = 0x4000, scoped, tag = 'input window, operand 2, single buffered']
    #allocation9 [shape = 'u8[16384]{0}', space=vmem, size = 0x4000, scoped, tag = 'input window, operand 3, single buffered']
    #allocation10 [shape = 's32[1]{0}', space=sflag, size = 0x4, scoped, tag = 'scoped memory for llama_attention_pallas.1']
    #allocation11 [shape = 'u8[8192]{0}', space=vmem, size = 0x2000, scoped, tag = 'output window, operand 0, single buffered']
    %11 = vsyncpa [#allocation4], 0
    %12 = vsyncpa [#allocation7], 0
    %13 = vsyncpa [#allocation10], 0
    %14 = vsyncpa [#allocation5], 0
    // Predicated region
    $region2: #{llama_attention_pallas.1} parent=1 // pred_check
      _
    $region3: #{llama_attention_pallas.1} parent=1 // pred_check_branch
      %16 = sbr.rel (0) target = $region5
    $region4: #{llama_attention_pallas.1} parent=1 // pred_region
      %s18 = ssub.s32 256, 256
      %19 = vsyncadd [#allocation4], %s18
      %s20 = sshll.u32 [#allocation3], 4
      %s21 = int_to_ptr.vmem [resolvable:$true] %s20
      %26 = dma.hbm_to_vmem [thread:$0]  %s0, 256, %s21, [#allocation4], 128, 128, 8
    $region5: #{llama_attention_pallas.1} parent=1 // pred_fallthru
      _
    // Predicated region
    $region6: #{llama_attention_pallas.1} parent=1 // pred_check
      _
    $region7: #{llama_attention_pallas.1} parent=1 // pred_check_branch
      %28 = sbr.rel (0) target = $region9
    $region8: #{llama_attention_pallas.1} parent=1 // pred_region
      %s30 = ssub.s32 512, 512
      %31 = vsyncadd [#allocation7], %s30
      %s32 = sshll.u32 [#allocation6], 4
      %s33 = int_to_ptr.vmem [resolvable:$true] %s32
      %38 = dma.hbm_to_vmem [thread:$0]  %s1, 512, %s33, [#allocation7], 128, 128, 8
    $region9: #{llama_attention_pallas.1} parent=1 // pred_fallthru
      _
    // Predicated region
    $region10: #{llama_attention_pallas.1} parent=1 // pred_check
      _
    $region11: #{llama_attention_pallas.1} parent=1 // pred_check_branch
      %40 = sbr.rel (0) target = $region13
    $region12: #{llama_attention_pallas.1} parent=1 // pred_region
      %s42 = ssub.s32 512, 512
      %43 = vsyncadd [#allocation7], %s42
      %s44 = sshll.u32 [#allocation8], 4
      %s45 = int_to_ptr.vmem [resolvable:$true] %s44
      %50 = dma.hbm_to_vmem [thread:$0]  %s2, 512, %s45, [#allocation7], 128, 128, 8
    $region13: #{llama_attention_pallas.1} parent=1 // pred_fallthru
      _
    // Predicated region
    $region14: #{llama_attention_pallas.1} parent=1 // pred_check
      _
    $region15: #{llama_attention_pallas.1} parent=1 // pred_check_branch
      %52 = sbr.rel (0) target = $region17
    $region16: #{llama_attention_pallas.1} parent=1 // pred_region
      %s54 = ssub.s32 512, 512
      %55 = vsyncadd [#allocation10], %s54
      %s56 = sshll.u32 [#allocation9], 4
      %s57 = int_to_ptr.vmem [resolvable:$true] %s56
      %62 = dma.hbm_to_vmem [thread:$0]  %s3, 512, %s57, [#allocation10], 256, 256, 16
    $region17: #{llama_attention_pallas.1} parent=1 // pred_fallthru
      _
    // Predicated region
    $region18: #{llama_attention_pallas.1} parent=1 // pred_check
      _
    $region19: #{llama_attention_pallas.1} parent=1 // pred_check_branch
      %64 = sbr.rel (0) target = $region21
    $region20: #{llama_attention_pallas.1} parent=1 // pred_region
      %65 = dma.done [#allocation4], 256
    $region21: #{llama_attention_pallas.1} parent=1 // pred_fallthru
      _
    // Predicated region
    $region22: #{llama_attention_pallas.1} parent=1 // pred_check
      _
    $region23: #{llama_attention_pallas.1} parent=1 // pred_check_branch
      %67 = sbr.rel (0) target = $region25
    $region24: #{llama_attention_pallas.1} parent=1 // pred_region
      %68 = dma.done [#allocation7], 512
    $region25: #{llama_attention_pallas.1} parent=1 // pred_fallthru
      _
    // Predicated region
    $region26: #{llama_attention_pallas.1} parent=1 // pred_check
      _
    $region27: #{llama_attention_pallas.1} parent=1 // pred_check_branch
      %70 = sbr.rel (0) target = $region29
    $region28: #{llama_attention_pallas.1} parent=1 // pred_region
      %71 = dma.done [#allocation7], 512
    $region29: #{llama_attention_pallas.1} parent=1 // pred_fallthru
      _
    // Predicated region
    $region30: #{llama_attention_pallas.1} parent=1 // pred_check
      _
    $region31: #{llama_attention_pallas.1} parent=1 // pred_check_branch
      %73 = sbr.rel (0) target = $region33
    $region32: #{llama_attention_pallas.1} parent=1 // pred_region
      %74 = dma.done [#allocation10], 512
    $region33: #{llama_attention_pallas.1} parent=1 // pred_fallthru
      _
    %v75 = vld [vmem:[#allocation3] sm:$0xff]
    %v76 = vld [vmem:[#allocation3 + $0x8] sm:$0xff]
    %v77 = vld [vmem:[#allocation6] sm:$0xff]
    %v78 = vld [vmem:[#allocation6 + $0x8] sm:$0xff]
    %v79 = vld [vmem:[#allocation6 + $0x10] sm:$0xff]
    %v80 = vld [vmem:[#allocation6 + $0x18] sm:$0xff]
    %vm81 = vcmask 261120
    %v83 = vsel %vm81, %v75, 0
    %v86 = vsel %vm81, %v76, 0
    %88 = vmatprep.subr.mxu0 0.0
    %89 = vmatpush1.msra.mxu0 0.0
    %90 = vmatprep.subr.mxu0 0.0
    %91 = vmatpush1.msra.mxu0 0.0
    %92 = vmatprep.subr.mxu0 0.0
    %93 = vmatpush1.msra.mxu0 0.0
    %94 = vmatprep.subr.mxu0 0.0
    %95 = vmatpush1.msra.mxu0 0.0
    %96 = vmatprep.subr.mxu0 0.0
    %97 = vmatpush1.msra.mxu0 0.0
    %98 = vmatprep.subr.mxu0 0.0
    %99 = vmatpush1.msra.mxu0 0.0
    %100 = vmatprep.subr.mxu0 0.0
    %101 = vmatpush1.msra.mxu0 0.0
    %102 = vmatprep.subr.mxu0 0.0
    %103 = vmatpush1.msra.mxu0 0.0
    %104 = vmatprep.subr.mxu0 0.0
    %105 = vmatpush1.msra.mxu0 0.0
    %106 = vmatprep.subr.mxu0 0.0
    %107 = vmatpush1.msra.mxu0 0.0
    %108 = vmatprep.subr.mxu0 0.0
    %109 = vmatpush1.msra.mxu0 0.0
    %110 = vmatprep.subr.mxu0 0.0
    %111 = vmatpush1.msra.mxu0 0.0
    %112 = vmatprep.subr.mxu0 0.0
    %113 = vmatpush1.msra.mxu0 %v80
    %114 = vmatprep.subr.mxu0 0.0
    %115 = vmatpush1.msra.mxu0 %v79
    %116 = vmatprep.subr.mxu0 0.0
    %117 = vmatpush1.msra.mxu0 %v78
    %118 = vmatprep.subr.mxu0 0.0
    %119 = vmatpush1.msra.mxu0 %v77
    %120 = vmatprep.subr.mxu0 0.0
    %121 = vmatpush2.msra.mxu0 0.0
    %122 = vmatprep.subr.mxu0 0.0
    %123 = vmatpush2.msra.mxu0 0.0
    %124 = vmatprep.subr.mxu0 0.0
    %125 = vmatpush2.msra.mxu0 0.0
    %126 = vmatprep.subr.mxu0 0.0
    %127 = vmatpush2.msra.mxu0 0.0
    %128 = vmatprep.subr.mxu0 0.0
    %129 = vmatpush2.msra.mxu0 0.0
    %130 = vmatprep.subr.mxu0 0.0
    %131 = vmatpush2.msra.mxu0 0.0
    %132 = vmatprep.subr.mxu0 0.0
    %133 = vmatpush2.msra.mxu0 0.0
    %134 = vmatprep.subr.mxu0 0.0
    %135 = vmatpush2.msra.mxu0 0.0
    %136 = vmatprep.subr.mxu0 0.0
    %137 = vmatpush2.msra.mxu0 0.0
    %138 = vmatprep.subr.mxu0 0.0
    %139 = vmatpush2.msra.mxu0 0.0
    %140 = vmatprep.subr.mxu0 0.0
    %141 = vmatpush2.msra.mxu0 0.0
    %142 = vmatprep.subr.mxu0 0.0
    %143 = vmatpush2.msra.mxu0 0.0
    %144 = vmatprep.subr.mxu0 0.0
    %145 = vmatpush2.msra.mxu0 0.0
    %146 = vmatprep.subr.mxu0 0.0
    %147 = vmatpush2.msra.mxu0 0.0
    %148 = vmatprep.subr.mxu0 0.0
    %149 = vmatpush2.msra.mxu0 0.0
    %150 = vmatprep.subr.mxu0 0.0
    %151 = vmatpush2.msra.mxu0 0.0
    %152 = vmatprep.mubr.f32.mxu0 0.0
    %153 = vmatmul.mubr.f32.gmra.mxu0 %v83
    %v154 = vpop.f32.mrf.mxu0
    %v155 = vadd.f32 0.0, %v154
    %v156 = vpop.f32.mrf.mxu0
    %157 = vmatprep.mubr.f32.mxu0 0.0
    %158 = vmatmul.mubr.f32.gmra.mxu0 %v86
    %v159 = vpop.f32.mrf.mxu0
    %v160 = vadd.f32 0.0, %v159
    %v161 = vpop.f32.mrf.mxu0
    %162 = vdwg.mxu0
    %v163 = vld [vmem:[#allocation9] sm:$0xff]
    %v164 = vld [vmem:[#allocation9 + $0x8] sm:$0xff]
    %v165 = vld [vmem:[#allocation9 + $0x10] sm:$0xff]
    %v166 = vld [vmem:[#allocation9 + $0x18] sm:$0xff]
    %169 = vrot.lane.b32.xlu0 %v155, 124
    %v170 = vpop.permute.xlu0 %169
    %171 = vrot.lane.b32.xlu0 %v160, 124
    %v172 = vpop.permute.xlu0 %171
    %175 = vrot.lane.b32.xlu0 %v155, 44
    %v176 = vpop.permute.xlu0 %175
    %177 = vrot.lane.b32.xlu0 %v160, 44
    %v178 = vpop.permute.xlu0 %177
    %vm181 = vcmask 359424
    %v182 = vsel %vm181, %v170, %v176
    %v183 = vsel %vm181, %v172, %v178
    %184 = vrot.lane.b32.xlu0 %v155, 84
    %v185 = vpop.permute.xlu0 %184
    %186 = vrot.lane.b32.xlu0 %v160, 84
    %v187 = vpop.permute.xlu0 %186
    %190 = vrot.lane.b32.xlu0 %v155, 4
    %v191 = vpop.permute.xlu0 %190
    %192 = vrot.lane.b32.xlu0 %v160, 4
    %v193 = vpop.permute.xlu0 %192
    %vm196 = vcmask 31744
    %v197 = vsel %vm196, %v185, %v191
    %v198 = vsel %vm196, %v187, %v193
    %v199 = vmul.f32 %v155, %v163
    %v200 = vmul.f32 %v160, %v165
    %203 = vrot.lane.b32.xlu0 %v163, 80
    %v204 = vpop.permute.xlu0 %203
    %205 = vrot.lane.b32.xlu0 %v165, 80
    %v206 = vpop.permute.xlu0 %205
    %v209 = vmul.f32 %v182, %v204
    %v210 = vmul.f32 %v183, %v206
    %v211 = vadd.f32 %v199, %v209
    %v212 = vadd.f32 %v200, %v210
    %215 = vrot.lane.b32.xlu0 %v163, 32
    %v216 = vpop.permute.xlu0 %215
    %217 = vrot.lane.b32.xlu0 %v164, 32
    %v218 = vpop.permute.xlu0 %217
    %219 = vrot.lane.b32.xlu0 %v165, 32
    %v220 = vpop.permute.xlu0 %219
    %221 = vrot.lane.b32.xlu0 %v166, 32
    %v222 = vpop.permute.xlu0 %221
    %v223 = vsel %vm81, %v216, %v218
    %v224 = vsel %vm81, %v220, %v222
    %v227 = vmul.f32 %v197, %v223
    %v228 = vmul.f32 %v198, %v224
    %v229 = vadd.f32 %v211, %v227
    %v230 = vadd.f32 %v212, %v228
    %v231 = vlaneseq
    %v232 = vshrl.u32 %v231, 7
    %v233 = vadd.s32 %v232, 8
    %v234 = vlaneseq
    %v235 = vand.u32 %v234, 127
    %v236 = vshra.s32 %v232, 3
    %v237 = vshra.s32 %v233, 3
    %v238 = vshra.s32 %v235, 3
    %vm239 = vcmp.eq.s32.totalorder %v236, %v238
    %vm240 = vcmp.eq.s32.totalorder %v237, %v238
    %v241 = vand.u32 %v235, 7
    %v242 = vand.u32 %v232, 7
    %v243 = vand.u32 %v233, 7
    %vm244 = vcmp.le.s32.totalorder %v241, %v242
    %vm245 = vcmp.le.s32.totalorder %v241, %v243
    %vm246 = vmand %vm239, %vm244
    %vm247 = vmand %vm240, %vm245
    %v248 = vsel %vm246, 0.0, -1e+09
    %v249 = vsel %vm247, 0.0, -1e+09
    %252 = vrot.lane.b32.xlu0 %v229, 96
    %v253 = vpop.permute.xlu0 %252
    %254 = vrot.lane.b32.xlu0 %v230, 96
    %v255 = vpop.permute.xlu0 %254
    %vm256 = vcmask 64512
    %v257 = vsel %vm256, %v229, 0
    %v259 = vsel %vm256, %v230, 0
    %v261 = vsel %vm256, %v253, 0
    %v263 = vsel %vm256, %v255, 0
    %265 = vmatprep.subr.mxu0 0.0
    %266 = vmatpush1.xpose.msra.mxu0 0.0
    %267 = vmatprep.subr.mxu0 0.0
    %268 = vmatpush1.xpose.msra.mxu0 0.0
    %269 = vmatprep.subr.mxu0 0.0
    %270 = vmatpush1.xpose.msra.mxu0 0.0
    %271 = vmatprep.subr.mxu0 0.0
    %272 = vmatpush1.xpose.msra.mxu0 0.0
    %273 = vmatprep.subr.mxu0 0.0
    %274 = vmatpush1.xpose.msra.mxu0 0.0
    %275 = vmatprep.subr.mxu0 0.0
    %276 = vmatpush1.xpose.msra.mxu0 0.0
    %277 = vmatprep.subr.mxu0 0.0
    %278 = vmatpush1.xpose.msra.mxu0 0.0
    %279 = vmatprep.subr.mxu0 0.0
    %280 = vmatpush1.xpose.msra.mxu0 0.0
    %281 = vmatprep.subr.mxu0 0.0
    %282 = vmatpush1.xpose.msra.mxu0 0.0
    %283 = vmatprep.subr.mxu0 0.0
    %284 = vmatpush1.xpose.msra.mxu0 0.0
    %285 = vmatprep.subr.mxu0 0.0
    %286 = vmatpush1.xpose.msra.mxu0 0.0
    %287 = vmatprep.subr.mxu0 0.0
    %288 = vmatpush1.xpose.msra.mxu0 0.0
    %289 = vmatprep.subr.mxu0 0.0
    %290 = vmatpush1.xpose.msra.mxu0 0.0
    %291 = vmatprep.subr.mxu0 0.0
    %292 = vmatpush1.xpose.msra.mxu0 0.0
    %293 = vmatprep.subr.mxu0 0.0
    %294 = vmatpush1.xpose.msra.mxu0 %v263
    %295 = vmatprep.subr.mxu0 0.0
    %296 = vmatpush1.xpose.msra.mxu0 %v261
    %297 = vmatprep.subr.mxu0 0.0
    %298 = vmatpush2.xpose.msra.mxu0 0.0
    %299 = vmatprep.subr.mxu0 0.0
    %300 = vmatpush2.xpose.msra.mxu0 0.0
    %301 = vmatprep.subr.mxu0 0.0
    %302 = vmatpush2.xpose.msra.mxu0 0.0
    %303 = vmatprep.subr.mxu0 0.0
    %304 = vmatpush2.xpose.msra.mxu0 0.0
    %305 = vmatprep.subr.mxu0 0.0
    %306 = vmatpush2.xpose.msra.mxu0 0.0
    %307 = vmatprep.subr.mxu0 0.0
    %308 = vmatpush2.xpose.msra.mxu0 0.0
    %309 = vmatprep.subr.mxu0 0.0
    %310 = vmatpush2.xpose.msra.mxu0 0.0
    %311 = vmatprep.subr.mxu0 0.0
    %312 = vmatpush2.xpose.msra.mxu0 0.0
    %313 = vmatprep.subr.mxu0 0.0
    %314 = vmatpush2.xpose.msra.mxu0 0.0
    %315 = vmatprep.subr.mxu0 0.0
    %316 = vmatpush2.xpose.msra.mxu0 0.0
    %317 = vmatprep.subr.mxu0 0.0
    %318 = vmatpush2.xpose.msra.mxu0 0.0
    %319 = vmatprep.subr.mxu0 0.0
    %320 = vmatpush2.xpose.msra.mxu0 0.0
    %321 = vmatprep.subr.mxu0 0.0
    %322 = vmatpush2.xpose.msra.mxu0 0.0
    %323 = vmatprep.subr.mxu0 0.0
    %324 = vmatpush2.xpose.msra.mxu0 0.0
    %325 = vmatprep.subr.mxu0 0.0
    %326 = vmatpush2.xpose.msra.mxu0 0.0
    %327 = vmatprep.subr.mxu0 0.0
    %328 = vmatpush2.xpose.msra.mxu0 0.0
    %329 = vmatprep.mubr.f32.mxu0 0.0
    %330 = vmatmul.mubr.f32.gmra.mxu0 %v257
    %v331 = vpop.f32.mrf.mxu0
    %v332 = vadd.f32 %v248, %v331
    %v333 = vpop.f32.mrf.mxu0
    %334 = vmatprep.mubr.f32.mxu0 0.0
    %335 = vmatmul.mubr.f32.gmra.mxu0 %v259
    %v336 = vpop.f32.mrf.mxu0
    %v337 = vadd.f32 %v249, %v336
    %v338 = vpop.f32.mrf.mxu0
    %339 = vdwg.mxu0
    %vm340 = vcmask 130048
    %v341 = vsel %vm340, %v332, -inf
    %342 = vmax.xlane.f32.xlu0 %v341
    %v343 = vpop.xlane.xlu0 %342
    %v344 = vsel %vm340, %v337, -inf
    %345 = vmax.xlane.f32.xlu0 %v344
    %v346 = vpop.xlane.xlu0 %345
    %v347 = vsub.f32 %v332, %v343
    %v348 = vsub.f32 %v337, %v346
    %v349 = vmul.f32 %v347, 1.442695
    %v350 = vpow.pop %v349
    %v351 = vmul.f32 %v348, 1.442695
    %v352 = vpow.pop %v351
    %v353 = vsel %vm340, %v350, 0.0
    %354 = vadd.xlane.f32.xlu0 %v353
    %v355 = vpop.xlane.xlu0 %354
    %v356 = vsel %vm340, %v352, 0.0
    %357 = vadd.xlane.f32.xlu0 %v356
    %v358 = vpop.xlane.xlu0 %357
    %v359 = vrcp.pop %v355
    %v360 = vrcp.pop %v358
    %v361 = vmul.f32 %v350, %v359
    %v362 = vmul.f32 %v352, %v360
    %363 = vst.msk [vmem:[%s5] sm:$0xff] %vm340, %v361
    %364 = vst.msk [vmem:[%s5 + $0x8] sm:$0xff] %vm340, %v362
    %365 = vrot.lane.b32.xlu0 %v155, 80
    %v366 = vpop.permute.xlu0 %365
    %367 = vrot.lane.b32.xlu0 %v160, 80
    %v368 = vpop.permute.xlu0 %367
    %v372 = vsel %vm340, %v361, 0
    %v375 = vsel %vm340, %v362, 0
    %377 = vmatprep.subr.mxu0 0.0
    %378 = vmatpush1.msra.mxu0 0.0
    %379 = vmatprep.subr.mxu0 0.0
    %380 = vmatpush1.msra.mxu0 0.0
    %381 = vmatprep.subr.mxu0 0.0
    %382 = vmatpush1.msra.mxu0 0.0
    %383 = vmatprep.subr.mxu0 0.0
    %384 = vmatpush1.msra.mxu0 0.0
    %385 = vmatprep.subr.mxu0 0.0
    %386 = vmatpush1.msra.mxu0 0.0
    %387 = vmatprep.subr.mxu0 0.0
    %388 = vmatpush1.msra.mxu0 0.0
    %389 = vmatprep.subr.mxu0 0.0
    %390 = vmatpush1.msra.mxu0 0.0
    %391 = vmatprep.subr.mxu0 0.0
    %392 = vmatpush1.msra.mxu0 0.0
    %393 = vmatprep.subr.mxu0 0.0
    %394 = vmatpush1.msra.mxu0 0.0
    %395 = vmatprep.subr.mxu0 0.0
    %396 = vmatpush1.msra.mxu0 0.0
    %397 = vmatprep.subr.mxu0 0.0
    %398 = vmatpush1.msra.mxu0 0.0
    %399 = vmatprep.subr.mxu0 0.0
    %400 = vmatpush1.msra.mxu0 0.0
    %401 = vmatprep.subr.mxu0 0.0
    %402 = vmatpush1.msra.mxu0 0.0
    %403 = vmatprep.subr.mxu0 0.0
    %404 = vmatpush1.msra.mxu0 0.0
    %405 = vmatprep.subr.mxu0 0.0
    %406 = vmatpush1.msra.mxu0 %v368
    %407 = vmatprep.subr.mxu0 0.0
    %408 = vmatpush1.msra.mxu0 %v366
    %409 = vmatprep.subr.mxu0 0.0
    %410 = vmatpush2.msra.mxu0 0.0
    %411 = vmatprep.subr.mxu0 0.0
    %412 = vmatpush2.msra.mxu0 0.0
    %413 = vmatprep.subr.mxu0 0.0
    %414 = vmatpush2.msra.mxu0 0.0
    %415 = vmatprep.subr.mxu0 0.0
    %416 = vmatpush2.msra.mxu0 0.0
    %417 = vmatprep.subr.mxu0 0.0
    %418 = vmatpush2.msra.mxu0 0.0
    %419 = vmatprep.subr.mxu0 0.0
    %420 = vmatpush2.msra.mxu0 0.0
    %421 = vmatprep.subr.mxu0 0.0
    %422 = vmatpush2.msra.mxu0 0.0
    %423 = vmatprep.subr.mxu0 0.0
    %424 = vmatpush2.msra.mxu0 0.0
    %425 = vmatprep.subr.mxu0 0.0
    %426 = vmatpush2.msra.mxu0 0.0
    %427 = vmatprep.subr.mxu0 0.0
    %428 = vmatpush2.msra.mxu0 0.0
    %429 = vmatprep.subr.mxu0 0.0
    %430 = vmatpush2.msra.mxu0 0.0
    %431 = vmatprep.subr.mxu0 0.0
    %432 = vmatpush2.msra.mxu0 0.0
    %433 = vmatprep.subr.mxu0 0.0
    %434 = vmatpush2.msra.mxu0 0.0
    %435 = vmatprep.subr.mxu0 0.0
    %436 = vmatpush2.msra.mxu0 0.0
    %437 = vmatprep.subr.mxu0 0.0
    %438 = vmatpush2.msra.mxu0 0.0
    %439 = vmatprep.subr.mxu0 0.0
    %440 = vmatpush2.msra.mxu0 0.0
    %441 = vmatprep.mubr.f32.mxu0 0.0
    %442 = vmatmul.mubr.f32.gmra.mxu0 %v372
    %v443 = vpop.f32.mrf.mxu0
    %v444 = vadd.f32 0.0, %v443
    %v445 = vpop.f32.mrf.mxu0
    %446 = vmatprep.mubr.f32.mxu0 0.0
    %447 = vmatmul.mubr.f32.gmra.mxu0 %v375
    %v448 = vpop.f32.mrf.mxu0
    %v449 = vadd.f32 0.0, %v448
    %v450 = vpop.f32.mrf.mxu0
    %451 = vdwg.mxu0
    %452 = vst.msk [vmem:[#allocation2] sm:$0xff] %vm256, %v444
    %453 = vst.msk [vmem:[#allocation2 + $0x8] sm:$0xff] %vm256, %v449
    %454 = vrot.lane.b32.xlu0 %v229, 120
    %v455 = vpop.permute.xlu0 %454
    %456 = vrot.lane.b32.xlu0 %v230, 120
    %v457 = vpop.permute.xlu0 %456
    %v458 = vsel %vm256, %v455, 0
    %v460 = vsel %vm256, %v457, 0
    %462 = vmatprep.subr.mxu0 0.0
    %463 = vmatpush1.xpose.msra.mxu0 0.0
    %464 = vmatprep.subr.mxu0 0.0
    %465 = vmatpush1.xpose.msra.mxu0 0.0
    %466 = vmatprep.subr.mxu0 0.0
    %467 = vmatpush1.xpose.msra.mxu0 0.0
    %468 = vmatprep.subr.mxu0 0.0
    %469 = vmatpush1.xpose.msra.mxu0 0.0
    %470 = vmatprep.subr.mxu0 0.0
    %471 = vmatpush1.xpose.msra.mxu0 0.0
    %472 = vmatprep.subr.mxu0 0.0
    %473 = vmatpush1.xpose.msra.mxu0 0.0
    %474 = vmatprep.subr.mxu0 0.0
    %475 = vmatpush1.xpose.msra.mxu0 0.0
    %476 = vmatprep.subr.mxu0 0.0
    %477 = vmatpush1.xpose.msra.mxu0 0.0
    %478 = vmatprep.subr.mxu0 0.0
    %479 = vmatpush1.xpose.msra.mxu0 0.0
    %480 = vmatprep.subr.mxu0 0.0
    %481 = vmatpush1.xpose.msra.mxu0 0.0
    %482 = vmatprep.subr.mxu0 0.0
    %483 = vmatpush1.xpose.msra.mxu0 0.0
    %484 = vmatprep.subr.mxu0 0.0
    %485 = vmatpush1.xpose.msra.mxu0 0.0
    %486 = vmatprep.subr.mxu0 0.0
    %487 = vmatpush1.xpose.msra.mxu0 0.0
    %488 = vmatprep.subr.mxu0 0.0
    %489 = vmatpush1.xpose.msra.mxu0 0.0
    %490 = vmatprep.subr.mxu0 0.0
    %491 = vmatpush1.xpose.msra.mxu0 %v263
    %492 = vmatprep.subr.mxu0 0.0
    %493 = vmatpush1.xpose.msra.mxu0 %v261
    %494 = vmatprep.subr.mxu0 0.0
    %495 = vmatpush2.xpose.msra.mxu0 0.0
    %496 = vmatprep.subr.mxu0 0.0
    %497 = vmatpush2.xpose.msra.mxu0 0.0
    %498 = vmatprep.subr.mxu0 0.0
    %499 = vmatpush2.xpose.msra.mxu0 0.0
    %500 = vmatprep.subr.mxu0 0.0
    %501 = vmatpush2.xpose.msra.mxu0 0.0
    %502 = vmatprep.subr.mxu0 0.0
    %503 = vmatpush2.xpose.msra.mxu0 0.0
    %504 = vmatprep.subr.mxu0 0.0
    %505 = vmatpush2.xpose.msra.mxu0 0.0
    %506 = vmatprep.subr.mxu0 0.0
    %507 = vmatpush2.xpose.msra.mxu0 0.0
    %508 = vmatprep.subr.mxu0 0.0
    %509 = vmatpush2.xpose.msra.mxu0 0.0
    %510 = vmatprep.subr.mxu0 0.0
    %511 = vmatpush2.xpose.msra.mxu0 0.0
    %512 = vmatprep.subr.mxu0 0.0
    %513 = vmatpush2.xpose.msra.mxu0 0.0
    %514 = vmatprep.subr.mxu0 0.0
    %515 = vmatpush2.xpose.msra.mxu0 0.0
    %516 = vmatprep.subr.mxu0 0.0
    %517 = vmatpush2.xpose.msra.mxu0 0.0
    %518 = vmatprep.subr.mxu0 0.0
    %519 = vmatpush2.xpose.msra.mxu0 0.0
    %520 = vmatprep.subr.mxu0 0.0
    %521 = vmatpush2.xpose.msra.mxu0 0.0
    %522 = vmatprep.subr.mxu0 0.0
    %523 = vmatpush2.xpose.msra.mxu0 0.0
    %524 = vmatprep.subr.mxu0 0.0
    %525 = vmatpush2.xpose.msra.mxu0 0.0
    %526 = vmatprep.mubr.f32.mxu0 0.0
    %527 = vmatmul.mubr.f32.gmra.mxu0 %v458
    %v528 = vpop.f32.mrf.mxu0
    %v529 = vadd.f32 %v248, %v528
    %v530 = vpop.f32.mrf.mxu0
    %531 = vmatprep.mubr.f32.mxu0 0.0
    %532 = vmatmul.mubr.f32.gmra.mxu0 %v460
    %v533 = vpop.f32.mrf.mxu0
    %v534 = vadd.f32 %v249, %v533
    %v535 = vpop.f32.mrf.mxu0
    %536 = vdwg.mxu0
    %v537 = vsel %vm340, %v529, -inf
    %538 = vmax.xlane.f32.xlu0 %v537
    %v539 = vpop.xlane.xlu0 %538
    %v540 = vsel %vm340, %v534, -inf
    %541 = vmax.xlane.f32.xlu0 %v540
    %v542 = vpop.xlane.xlu0 %541
    %v543 = vsub.f32 %v529, %v539
    %v544 = vsub.f32 %v534, %v542
    %v545 = vmul.f32 %v543, 1.442695
    %v546 = vpow.pop %v545
    %v547 = vmul.f32 %v544, 1.442695
    %v548 = vpow.pop %v547
    %v549 = vsel %vm340, %v546, 0.0
    %550 = vadd.xlane.f32.xlu0 %v549
    %v551 = vpop.xlane.xlu0 %550
    %v552 = vsel %vm340, %v548, 0.0
    %553 = vadd.xlane.f32.xlu0 %v552
    %v554 = vpop.xlane.xlu0 %553
    %v555 = vrcp.pop %v551
    %v556 = vrcp.pop %v554
    %v557 = vmul.f32 %v546, %v555
    %v558 = vmul.f32 %v548, %v556
    %561 = vrot.lane.b32.xlu0 %v557, 16
    %v562 = vpop.permute.xlu0 %561
    %563 = vrot.lane.b32.xlu0 %v558, 16
    %v564 = vpop.permute.xlu0 %563
    %vm567 = vcmask 261248
    %568 = vst.msk [vmem:[%s5] sm:$0xff] %vm567, %v562
    %569 = vst.msk [vmem:[%s5 + $0x8] sm:$0xff] %vm567, %v564
    %v570 = vsel %vm340, %v557, 0
    %v572 = vsel %vm340, %v558, 0
    %574 = vmatprep.subr.mxu0 0.0
    %575 = vmatpush1.msra.mxu0 0.0
    %576 = vmatprep.subr.mxu0 0.0
    %577 = vmatpush1.msra.mxu0 0.0
    %578 = vmatprep.subr.mxu0 0.0
    %579 = vmatpush1.msra.mxu0 0.0
    %580 = vmatprep.subr.mxu0 0.0
    %581 = vmatpush1.msra.mxu0 0.0
    %582 = vmatprep.subr.mxu0 0.0
    %583 = vmatpush1.msra.mxu0 0.0
    %584 = vmatprep.subr.mxu0 0.0
    %585 = vmatpush1.msra.mxu0 0.0
    %586 = vmatprep.subr.mxu0 0.0
    %587 = vmatpush1.msra.mxu0 0.0
    %588 = vmatprep.subr.mxu0 0.0
    %589 = vmatpush1.msra.mxu0 0.0
    %590 = vmatprep.subr.mxu0 0.0
    %591 = vmatpush1.msra.mxu0 0.0
    %592 = vmatprep.subr.mxu0 0.0
    %593 = vmatpush1.msra.mxu0 0.0
    %594 = vmatprep.subr.mxu0 0.0
    %595 = vmatpush1.msra.mxu0 0.0
    %596 = vmatprep.subr.mxu0 0.0
    %597 = vmatpush1.msra.mxu0 0.0
    %598 = vmatprep.subr.mxu0 0.0
    %599 = vmatpush1.msra.mxu0 0.0
    %600 = vmatprep.subr.mxu0 0.0
    %601 = vmatpush1.msra.mxu0 0.0
    %602 = vmatprep.subr.mxu0 0.0
    %603 = vmatpush1.msra.mxu0 %v368
    %604 = vmatprep.subr.mxu0 0.0
    %605 = vmatpush1.msra.mxu0 %v366
    %606 = vmatprep.subr.mxu0 0.0
    %607 = vmatpush2.msra.mxu0 0.0
    %608 = vmatprep.subr.mxu0 0.0
    %609 = vmatpush2.msra.mxu0 0.0
    %610 = vmatprep.subr.mxu0 0.0
    %611 = vmatpush2.msra.mxu0 0.0
    %612 = vmatprep.subr.mxu0 0.0
    %613 = vmatpush2.msra.mxu0 0.0
    %614 = vmatprep.subr.mxu0 0.0
    %615 = vmatpush2.msra.mxu0 0.0
    %616 = vmatprep.subr.mxu0 0.0
    %617 = vmatpush2.msra.mxu0 0.0
    %618 = vmatprep.subr.mxu0 0.0
    %619 = vmatpush2.msra.mxu0 0.0
    %620 = vmatprep.subr.mxu0 0.0
    %621 = vmatpush2.msra.mxu0 0.0
    %622 = vmatprep.subr.mxu0 0.0
    %623 = vmatpush2.msra.mxu0 0.0
    %624 = vmatprep.subr.mxu0 0.0
    %625 = vmatpush2.msra.mxu0 0.0
    %626 = vmatprep.subr.mxu0 0.0
    %627 = vmatpush2.msra.mxu0 0.0
    %628 = vmatprep.subr.mxu0 0.0
    %629 = vmatpush2.msra.mxu0 0.0
    %630 = vmatprep.subr.mxu0 0.0
    %631 = vmatpush2.msra.mxu0 0.0
    %632 = vmatprep.subr.mxu0 0.0
    %633 = vmatpush2.msra.mxu0 0.0
    %634 = vmatprep.subr.mxu0 0.0
    %635 = vmatpush2.msra.mxu0 0.0
    %636 = vmatprep.subr.mxu0 0.0
    %637 = vmatpush2.msra.mxu0 0.0
    %638 = vmatprep.mubr.f32.mxu0 0.0
    %639 = vmatmul.mubr.f32.gmra.mxu0 %v570
    %v640 = vpop.f32.mrf.mxu0
    %v641 = vadd.f32 0.0, %v640
    %v642 = vpop.f32.mrf.mxu0
    %643 = vmatprep.mubr.f32.mxu0 0.0
    %644 = vmatmul.mubr.f32.gmra.mxu0 %v572
    %v645 = vpop.f32.mrf.mxu0
    %v646 = vadd.f32 0.0, %v645
    %v647 = vpop.f32.mrf.mxu0
    %648 = vdwg.mxu0
    %651 = vrot.lane.b32.xlu0 %v641, 8
    %v652 = vpop.permute.xlu0 %651
    %653 = vrot.lane.b32.xlu0 %v646, 8
    %v654 = vpop.permute.xlu0 %653
    %vm657 = vcmask 130112
    %658 = vst.msk [vmem:[#allocation2] sm:$0xff] %vm657, %v652
    %659 = vst.msk [vmem:[#allocation2 + $0x8] sm:$0xff] %vm657, %v654
    %660 = vrot.lane.b32.xlu0 %v229, 112
    %v661 = vpop.permute.xlu0 %660
    %662 = vrot.lane.b32.xlu0 %v230, 112
    %v663 = vpop.permute.xlu0 %662
    %664 = vrot.lane.b32.xlu0 %v229, 88
    %v665 = vpop.permute.xlu0 %664
    %666 = vrot.lane.b32.xlu0 %v230, 88
    %v667 = vpop.permute.xlu0 %666
    %v668 = vsel %vm256, %v661, 0
    %v670 = vsel %vm256, %v663, 0
    %v672 = vsel %vm256, %v665, 0
    %v674 = vsel %vm256, %v667, 0
    %676 = vmatprep.subr.mxu0 0.0
    %677 = vmatpush1.xpose.msra.mxu0 0.0
    %678 = vmatprep.subr.mxu0 0.0
    %679 = vmatpush1.xpose.msra.mxu0 0.0
    %680 = vmatprep.subr.mxu0 0.0
    %681 = vmatpush1.xpose.msra.mxu0 0.0
    %682 = vmatprep.subr.mxu0 0.0
    %683 = vmatpush1.xpose.msra.mxu0 0.0
    %684 = vmatprep.subr.mxu0 0.0
    %685 = vmatpush1.xpose.msra.mxu0 0.0
    %686 = vmatprep.subr.mxu0 0.0
    %687 = vmatpush1.xpose.msra.mxu0 0.0
    %688 = vmatprep.subr.mxu0 0.0
    %689 = vmatpush1.xpose.msra.mxu0 0.0
    %690 = vmatprep.subr.mxu0 0.0
    %691 = vmatpush1.xpose.msra.mxu0 0.0
    %692 = vmatprep.subr.mxu0 0.0
    %693 = vmatpush1.xpose.msra.mxu0 0.0
    %694 = vmatprep.subr.mxu0 0.0
    %695 = vmatpush1.xpose.msra.mxu0 0.0
    %696 = vmatprep.subr.mxu0 0.0
    %697 = vmatpush1.xpose.msra.mxu0 0.0
    %698 = vmatprep.subr.mxu0 0.0
    %699 = vmatpush1.xpose.msra.mxu0 0.0
    %700 = vmatprep.subr.mxu0 0.0
    %701 = vmatpush1.xpose.msra.mxu0 0.0
    %702 = vmatprep.subr.mxu0 0.0
    %703 = vmatpush1.xpose.msra.mxu0 0.0
    %704 = vmatprep.subr.mxu0 0.0
    %705 = vmatpush1.xpose.msra.mxu0 %v674
    %706 = vmatprep.subr.mxu0 0.0
    %707 = vmatpush1.xpose.msra.mxu0 %v672
    %708 = vmatprep.subr.mxu0 0.0
    %709 = vmatpush2.xpose.msra.mxu0 0.0
    %710 = vmatprep.subr.mxu0 0.0
    %711 = vmatpush2.xpose.msra.mxu0 0.0
    %712 = vmatprep.subr.mxu0 0.0
    %713 = vmatpush2.xpose.msra.mxu0 0.0
    %714 = vmatprep.subr.mxu0 0.0
    %715 = vmatpush2.xpose.msra.mxu0 0.0
    %716 = vmatprep.subr.mxu0 0.0
    %717 = vmatpush2.xpose.msra.mxu0 0.0
    %718 = vmatprep.subr.mxu0 0.0
    %719 = vmatpush2.xpose.msra.mxu0 0.0
    %720 = vmatprep.subr.mxu0 0.0
    %721 = vmatpush2.xpose.msra.mxu0 0.0
    %722 = vmatprep.subr.mxu0 0.0
    %723 = vmatpush2.xpose.msra.mxu0 0.0
    %724 = vmatprep.subr.mxu0 0.0
    %725 = vmatpush2.xpose.msra.mxu0 0.0
    %726 = vmatprep.subr.mxu0 0.0
    %727 = vmatpush2.xpose.msra.mxu0 0.0
    %728 = vmatprep.subr.mxu0 0.0
    %729 = vmatpush2.xpose.msra.mxu0 0.0
    %730 = vmatprep.subr.mxu0 0.0
    %731 = vmatpush2.xpose.msra.mxu0 0.0
    %732 = vmatprep.subr.mxu0 0.0
    %733 = vmatpush2.xpose.msra.mxu0 0.0
    %734 = vmatprep.subr.mxu0 0.0
    %735 = vmatpush2.xpose.msra.mxu0 0.0
    %736 = vmatprep.subr.mxu0 0.0
    %737 = vmatpush2.xpose.msra.mxu0 0.0
    %738 = vmatprep.subr.mxu0 0.0
    %739 = vmatpush2.xpose.msra.mxu0 0.0
    %740 = vmatprep.mubr.f32.mxu0 0.0
    %741 = vmatmul.mubr.f32.gmra.mxu0 %v668
    %v742 = vpop.f32.mrf.mxu0
    %v743 = vadd.f32 %v248, %v742
    %v744 = vpop.f32.mrf.mxu0
    %745 = vmatprep.mubr.f32.mxu0 0.0
    %746 = vmatmul.mubr.f32.gmra.mxu0 %v670
    %v747 = vpop.f32.mrf.mxu0
    %v748 = vadd.f32 %v249, %v747
    %v749 = vpop.f32.mrf.mxu0
    %750 = vdwg.mxu0
    %v751 = vsel %vm340, %v743, -inf
    %752 = vmax.xlane.f32.xlu0 %v751
    %v753 = vpop.xlane.xlu0 %752
    %v754 = vsel %vm340, %v748, -inf
    %755 = vmax.xlane.f32.xlu0 %v754
    %v756 = vpop.xlane.xlu0 %755
    %v757 = vsub.f32 %v743, %v753
    %v758 = vsub.f32 %v748, %v756
    %v759 = vmul.f32 %v757, 1.442695
    %v760 = vpow.pop %v759
    %v761 = vmul.f32 %v758, 1.442695
    %v762 = vpow.pop %v761
    %v763 = vsel %vm340, %v760, 0.0
    %764 = vadd.xlane.f32.xlu0 %v763
    %v765 = vpop.xlane.xlu0 %764
    %v766 = vsel %vm340, %v762, 0.0
    %767 = vadd.xlane.f32.xlu0 %v766
    %v768 = vpop.xlane.xlu0 %767
    %v769 = vrcp.pop %v765
    %v770 = vrcp.pop %v768
    %v771 = vmul.f32 %v760, %v769
    %v772 = vmul.f32 %v762, %v770
    %775 = vrot.lane.b32.xlu0 %v771, 32
    %v776 = vpop.permute.xlu0 %775
    %777 = vrot.lane.b32.xlu0 %v772, 32
    %v778 = vpop.permute.xlu0 %777
    %vm781 = vcmask 392448
    %782 = vst.msk [vmem:[%s5] sm:$0xff] %vm781, %v776
    %783 = vst.msk [vmem:[%s5 + $0x8] sm:$0xff] %vm781, %v778
    %784 = vrot.lane.b32.xlu0 %v155, 72
    %v785 = vpop.permute.xlu0 %784
    %786 = vrot.lane.b32.xlu0 %v160, 72
    %v787 = vpop.permute.xlu0 %786
    %v790 = vsel %vm340, %v771, 0
    %v792 = vsel %vm340, %v772, 0
    %794 = vmatprep.subr.mxu0 0.0
    %795 = vmatpush1.msra.mxu0 0.0
    %796 = vmatprep.subr.mxu0 0.0
    %797 = vmatpush1.msra.mxu0 0.0
    %798 = vmatprep.subr.mxu0 0.0
    %799 = vmatpush1.msra.mxu0 0.0
    %800 = vmatprep.subr.mxu0 0.0
    %801 = vmatpush1.msra.mxu0 0.0
    %802 = vmatprep.subr.mxu0 0.0
    %803 = vmatpush1.msra.mxu0 0.0
    %804 = vmatprep.subr.mxu0 0.0
    %805 = vmatpush1.msra.mxu0 0.0
    %806 = vmatprep.subr.mxu0 0.0
    %807 = vmatpush1.msra.mxu0 0.0
    %808 = vmatprep.subr.mxu0 0.0
    %809 = vmatpush1.msra.mxu0 0.0
    %810 = vmatprep.subr.mxu0 0.0
    %811 = vmatpush1.msra.mxu0 0.0
    %812 = vmatprep.subr.mxu0 0.0
    %813 = vmatpush1.msra.mxu0 0.0
    %814 = vmatprep.subr.mxu0 0.0
    %815 = vmatpush1.msra.mxu0 0.0
    %816 = vmatprep.subr.mxu0 0.0
    %817 = vmatpush1.msra.mxu0 0.0
    %818 = vmatprep.subr.mxu0 0.0
    %819 = vmatpush1.msra.mxu0 0.0
    %820 = vmatprep.subr.mxu0 0.0
    %821 = vmatpush1.msra.mxu0 0.0
    %822 = vmatprep.subr.mxu0 0.0
    %823 = vmatpush1.msra.mxu0 %v787
    %824 = vmatprep.subr.mxu0 0.0
    %825 = vmatpush1.msra.mxu0 %v785
    %826 = vmatprep.subr.mxu0 0.0
    %827 = vmatpush2.msra.mxu0 0.0
    %828 = vmatprep.subr.mxu0 0.0
    %829 = vmatpush2.msra.mxu0 0.0
    %830 = vmatprep.subr.mxu0 0.0
    %831 = vmatpush2.msra.mxu0 0.0
    %832 = vmatprep.subr.mxu0 0.0
    %833 = vmatpush2.msra.mxu0 0.0
    %834 = vmatprep.subr.mxu0 0.0
    %835 = vmatpush2.msra.mxu0 0.0
    %836 = vmatprep.subr.mxu0 0.0
    %837 = vmatpush2.msra.mxu0 0.0
    %838 = vmatprep.subr.mxu0 0.0
    %839 = vmatpush2.msra.mxu0 0.0
    %840 = vmatprep.subr.mxu0 0.0
    %841 = vmatpush2.msra.mxu0 0.0
    %842 = vmatprep.subr.mxu0 0.0
    %843 = vmatpush2.msra.mxu0 0.0
    %844 = vmatprep.subr.mxu0 0.0
    %845 = vmatpush2.msra.mxu0 0.0
    %846 = vmatprep.subr.mxu0 0.0
    %847 = vmatpush2.msra.mxu0 0.0
    %848 = vmatprep.subr.mxu0 0.0
    %849 = vmatpush2.msra.mxu0 0.0
    %850 = vmatprep.subr.mxu0 0.0
    %851 = vmatpush2.msra.mxu0 0.0
    %852 = vmatprep.subr.mxu0 0.0
    %853 = vmatpush2.msra.mxu0 0.0
    %854 = vmatprep.subr.mxu0 0.0
    %855 = vmatpush2.msra.mxu0 0.0
    %856 = vmatprep.subr.mxu0 0.0
    %857 = vmatpush2.msra.mxu0 0.0
    %858 = vmatprep.mubr.f32.mxu0 0.0
    %859 = vmatmul.mubr.f32.gmra.mxu0 %v790
    %v860 = vpop.f32.mrf.mxu0
    %v861 = vadd.f32 0.0, %v860
    %v862 = vpop.f32.mrf.mxu0
    %863 = vmatprep.mubr.f32.mxu0 0.0
    %864 = vmatmul.mubr.f32.gmra.mxu0 %v792
    %v865 = vpop.f32.mrf.mxu0
    %v866 = vadd.f32 0.0, %v865
    %v867 = vpop.f32.mrf.mxu0
    %868 = vdwg.mxu0
    %871 = vrot.lane.b32.xlu0 %v861, 16
    %v872 = vpop.permute.xlu0 %871
    %873 = vrot.lane.b32.xlu0 %v866, 16
    %v874 = vpop.permute.xlu0 %873
    %vm877 = vcmask 195712
    %878 = vst.msk [vmem:[#allocation2] sm:$0xff] %vm877, %v872
    %879 = vst.msk [vmem:[#allocation2 + $0x8] sm:$0xff] %vm877, %v874
    %880 = vrot.lane.b32.xlu0 %v229, 104
    %v881 = vpop.permute.xlu0 %880
    %882 = vrot.lane.b32.xlu0 %v230, 104
    %v883 = vpop.permute.xlu0 %882
    %v884 = vsel %vm256, %v881, 0
    %v886 = vsel %vm256, %v883, 0
    %888 = vmatprep.subr.mxu0 0.0
    %889 = vmatpush1.xpose.msra.mxu0 0.0
    %890 = vmatprep.subr.mxu0 0.0
    %891 = vmatpush1.xpose.msra.mxu0 0.0
    %892 = vmatprep.subr.mxu0 0.0
    %893 = vmatpush1.xpose.msra.mxu0 0.0
    %894 = vmatprep.subr.mxu0 0.0
    %895 = vmatpush1.xpose.msra.mxu0 0.0
    %896 = vmatprep.subr.mxu0 0.0
    %897 = vmatpush1.xpose.msra.mxu0 0.0
    %898 = vmatprep.subr.mxu0 0.0
    %899 = vmatpush1.xpose.msra.mxu0 0.0
    %900 = vmatprep.subr.mxu0 0.0
    %901 = vmatpush1.xpose.msra.mxu0 0.0
    %902 = vmatprep.subr.mxu0 0.0
    %903 = vmatpush1.xpose.msra.mxu0 0.0
    %904 = vmatprep.subr.mxu0 0.0
    %905 = vmatpush1.xpose.msra.mxu0 0.0
    %906 = vmatprep.subr.mxu0 0.0
    %907 = vmatpush1.xpose.msra.mxu0 0.0
    %908 = vmatprep.subr.mxu0 0.0
    %909 = vmatpush1.xpose.msra.mxu0 0.0
    %910 = vmatprep.subr.mxu0 0.0
    %911 = vmatpush1.xpose.msra.mxu0 0.0
    %912 = vmatprep.subr.mxu0 0.0
    %913 = vmatpush1.xpose.msra.mxu0 0.0
    %914 = vmatprep.subr.mxu0 0.0
    %915 = vmatpush1.xpose.msra.mxu0 0.0
    %916 = vmatprep.subr.mxu0 0.0
    %917 = vmatpush1.xpose.msra.mxu0 %v674
    %918 = vmatprep.subr.mxu0 0.0
    %919 = vmatpush1.xpose.msra.mxu0 %v672
    %920 = vmatprep.subr.mxu0 0.0
    %921 = vmatpush2.xpose.msra.mxu0 0.0
    %922 = vmatprep.subr.mxu0 0.0
    %923 = vmatpush2.xpose.msra.mxu0 0.0
    %924 = vmatprep.subr.mxu0 0.0
    %925 = vmatpush2.xpose.msra.mxu0 0.0
    %926 = vmatprep.subr.mxu0 0.0
    %927 = vmatpush2.xpose.msra.mxu0 0.0
    %928 = vmatprep.subr.mxu0 0.0
    %929 = vmatpush2.xpose.msra.mxu0 0.0
    %930 = vmatprep.subr.mxu0 0.0
    %931 = vmatpush2.xpose.msra.mxu0 0.0
    %932 = vmatprep.subr.mxu0 0.0
    %933 = vmatpush2.xpose.msra.mxu0 0.0
    %934 = vmatprep.subr.mxu0 0.0
    %935 = vmatpush2.xpose.msra.mxu0 0.0
    %936 = vmatprep.subr.mxu0 0.0
    %937 = vmatpush2.xpose.msra.mxu0 0.0
    %938 = vmatprep.subr.mxu0 0.0
    %939 = vmatpush2.xpose.msra.mxu0 0.0
    %940 = vmatprep.subr.mxu0 0.0
    %941 = vmatpush2.xpose.msra.mxu0 0.0
    %942 = vmatprep.subr.mxu0 0.0
    %943 = vmatpush2.xpose.msra.mxu0 0.0
    %944 = vmatprep.subr.mxu0 0.0
    %945 = vmatpush2.xpose.msra.mxu0 0.0
    %946 = vmatprep.subr.mxu0 0.0
    %947 = vmatpush2.xpose.msra.mxu0 0.0
    %948 = vmatprep.subr.mxu0 0.0
    %949 = vmatpush2.xpose.msra.mxu0 0.0
    %950 = vmatprep.subr.mxu0 0.0
    %951 = vmatpush2.xpose.msra.mxu0 0.0
    %952 = vmatprep.mubr.f32.mxu0 0.0
    %953 = vmatmul.mubr.f32.gmra.mxu0 %v884
    %v954 = vpop.f32.mrf.mxu0
    %v955 = vadd.f32 %v248, %v954
    %v956 = vpop.f32.mrf.mxu0
    %957 = vmatprep.mubr.f32.mxu0 0.0
    %958 = vmatmul.mubr.f32.gmra.mxu0 %v886
    %v959 = vpop.f32.mrf.mxu0
    %v960 = vadd.f32 %v249, %v959
    %v961 = vpop.f32.mrf.mxu0
    %962 = vdwg.mxu0
    %v963 = vsel %vm340, %v955, -inf
    %964 = vmax.xlane.f32.xlu0 %v963
    %v965 = vpop.xlane.xlu0 %964
    %v966 = vsel %vm340, %v960, -inf
    %967 = vmax.xlane.f32.xlu0 %v966
    %v968 = vpop.xlane.xlu0 %967
    %v969 = vsub.f32 %v955, %v965
    %v970 = vsub.f32 %v960, %v968
    %v971 = vmul.f32 %v969, 1.442695
    %v972 = vpow.pop %v971
    %v973 = vmul.f32 %v970, 1.442695
    %v974 = vpow.pop %v973
    %v975 = vsel %vm340, %v972, 0.0
    %976 = vadd.xlane.f32.xlu0 %v975
    %v977 = vpop.xlane.xlu0 %976
    %v978 = vsel %vm340, %v974, 0.0
    %979 = vadd.xlane.f32.xlu0 %v978
    %v980 = vpop.xlane.xlu0 %979
    %v981 = vrcp.pop %v977
    %v982 = vrcp.pop %v980
    %v983 = vmul.f32 %v972, %v981
    %v984 = vmul.f32 %v974, %v982
    %987 = vrot.lane.b32.xlu0 %v983, 48
    %v988 = vpop.permute.xlu0 %987
    %989 = vrot.lane.b32.xlu0 %v984, 48
    %v990 = vpop.permute.xlu0 %989
    %vm993 = vcmask 523648
    %994 = vst.msk [vmem:[%s5] sm:$0xff] %vm993, %v988
    %995 = vst.msk [vmem:[%s5 + $0x8] sm:$0xff] %vm993, %v990
    %v996 = vsel %vm340, %v983, 0
    %v998 = vsel %vm340, %v984, 0
    %1000 = vmatprep.subr.mxu0 0.0
    %1001 = vmatpush1.msra.mxu0 0.0
    %1002 = vmatprep.subr.mxu0 0.0
    %1003 = vmatpush1.msra.mxu0 0.0
    %1004 = vmatprep.subr.mxu0 0.0
    %1005 = vmatpush1.msra.mxu0 0.0
    %1006 = vmatprep.subr.mxu0 0.0
    %1007 = vmatpush1.msra.mxu0 0.0
    %1008 = vmatprep.subr.mxu0 0.0
    %1009 = vmatpush1.msra.mxu0 0.0
    %1010 = vmatprep.subr.mxu0 0.0
    %1011 = vmatpush1.msra.mxu0 0.0
    %1012 = vmatprep.subr.mxu0 0.0
    %1013 = vmatpush1.msra.mxu0 0.0
    %1014 = vmatprep.subr.mxu0 0.0
    %1015 = vmatpush1.msra.mxu0 0.0
    %1016 = vmatprep.subr.mxu0 0.0
    %1017 = vmatpush1.msra.mxu0 0.0
    %1018 = vmatprep.subr.mxu0 0.0
    %1019 = vmatpush1.msra.mxu0 0.0
    %1020 = vmatprep.subr.mxu0 0.0
    %1021 = vmatpush1.msra.mxu0 0.0
    %1022 = vmatprep.subr.mxu0 0.0
    %1023 = vmatpush1.msra.mxu0 0.0
    %1024 = vmatprep.subr.mxu0 0.0
    %1025 = vmatpush1.msra.mxu0 0.0
    %1026 = vmatprep.subr.mxu0 0.0
    %1027 = vmatpush1.msra.mxu0 0.0
    %1028 = vmatprep.subr.mxu0 0.0
    %1029 = vmatpush1.msra.mxu0 %v787
    %1030 = vmatprep.subr.mxu0 0.0
    %1031 = vmatpush1.msra.mxu0 %v785
    %1032 = vmatprep.subr.mxu0 0.0
    %1033 = vmatpush2.msra.mxu0 0.0
    %1034 = vmatprep.subr.mxu0 0.0
    %1035 = vmatpush2.msra.mxu0 0.0
    %1036 = vmatprep.subr.mxu0 0.0
    %1037 = vmatpush2.msra.mxu0 0.0
    %1038 = vmatprep.subr.mxu0 0.0
    %1039 = vmatpush2.msra.mxu0 0.0
    %1040 = vmatprep.subr.mxu0 0.0
    %1041 = vmatpush2.msra.mxu0 0.0
    %1042 = vmatprep.subr.mxu0 0.0
    %1043 = vmatpush2.msra.mxu0 0.0
    %1044 = vmatprep.subr.mxu0 0.0
    %1045 = vmatpush2.msra.mxu0 0.0
    %1046 = vmatprep.subr.mxu0 0.0
    %1047 = vmatpush2.msra.mxu0 0.0
    %1048 = vmatprep.subr.mxu0 0.0
    %1049 = vmatpush2.msra.mxu0 0.0
    %1050 = vmatprep.subr.mxu0 0.0
    %1051 = vmatpush2.msra.mxu0 0.0
    %1052 = vmatprep.subr.mxu0 0.0
    %1053 = vmatpush2.msra.mxu0 0.0
    %1054 = vmatprep.subr.mxu0 0.0
    %1055 = vmatpush2.msra.mxu0 0.0
    %1056 = vmatprep.subr.mxu0 0.0
    %1057 = vmatpush2.msra.mxu0 0.0
    %1058 = vmatprep.subr.mxu0 0.0
    %1059 = vmatpush2.msra.mxu0 0.0
    %1060 = vmatprep.subr.mxu0 0.0
    %1061 = vmatpush2.msra.mxu0 0.0
    %1062 = vmatprep.subr.mxu0 0.0
    %1063 = vmatpush2.msra.mxu0 0.0
    %1064 = vmatprep.mubr.f32.mxu0 0.0
    %1065 = vmatmul.mubr.f32.gmra.mxu0 %v996
    %v1066 = vpop.f32.mrf.mxu0
    %v1067 = vadd.f32 0.0, %v1066
    %v1068 = vpop.f32.mrf.mxu0
    %1069 = vmatprep.mubr.f32.mxu0 0.0
    %1070 = vmatmul.mubr.f32.gmra.mxu0 %v998
    %v1071 = vpop.f32.mrf.mxu0
    %v1072 = vadd.f32 0.0, %v1071
    %v1073 = vpop.f32.mrf.mxu0
    %1074 = vdwg.mxu0
    %1077 = vrot.lane.b32.xlu0 %v1067, 24
    %v1078 = vpop.permute.xlu0 %1077
    %1079 = vrot.lane.b32.xlu0 %v1072, 24
    %v1080 = vpop.permute.xlu0 %1079
    %vm1083 = vcmask 261312
    %1084 = vst.msk [vmem:[#allocation2] sm:$0xff] %vm1083, %v1078
    %1085 = vst.msk [vmem:[#allocation2 + $0x8] sm:$0xff] %vm1083, %v1080
    %v1086 = vld [vmem:[#allocation2] sm:$0xff]
    %v1087 = vld [vmem:[#allocation2 + $0x8] sm:$0xff]
    %v1088 = vld [vmem:[#allocation8] sm:$0xff]
    %v1089 = vld [vmem:[#allocation8 + $0x8] sm:$0xff]
    %v1090 = vld [vmem:[#allocation8 + $0x10] sm:$0xff]
    %v1091 = vld [vmem:[#allocation8 + $0x18] sm:$0xff]
    %v1093 = vsel %vm81, %v1086, 0
    %v1096 = vsel %vm81, %v1087, 0
    %1098 = vmatprep.subr.mxu0 0.0
    %1099 = vmatpush1.msra.mxu0 0.0
    %1100 = vmatprep.subr.mxu0 0.0
    %1101 = vmatpush1.msra.mxu0 0.0
    %1102 = vmatprep.subr.mxu0 0.0
    %1103 = vmatpush1.msra.mxu0 0.0
    %1104 = vmatprep.subr.mxu0 0.0
    %1105 = vmatpush1.msra.mxu0 0.0
    %1106 = vmatprep.subr.mxu0 0.0
    %1107 = vmatpush1.msra.mxu0 0.0
    %1108 = vmatprep.subr.mxu0 0.0
    %1109 = vmatpush1.msra.mxu0 0.0
    %1110 = vmatprep.subr.mxu0 0.0
    %1111 = vmatpush1.msra.mxu0 0.0
    %1112 = vmatprep.subr.mxu0 0.0
    %1113 = vmatpush1.msra.mxu0 0.0
    %1114 = vmatprep.subr.mxu0 0.0
    %1115 = vmatpush1.msra.mxu0 0.0
    %1116 = vmatprep.subr.mxu0 0.0
    %1117 = vmatpush1.msra.mxu0 0.0
    %1118 = vmatprep.subr.mxu0 0.0
    %1119 = vmatpush1.msra.mxu0 0.0
    %1120 = vmatprep.subr.mxu0 0.0
    %1121 = vmatpush1.msra.mxu0 0.0
    %1122 = vmatprep.subr.mxu0 0.0
    %1123 = vmatpush1.msra.mxu0 %v1091
    %1124 = vmatprep.subr.mxu0 0.0
    %1125 = vmatpush1.msra.mxu0 %v1090
    %1126 = vmatprep.subr.mxu0 0.0
    %1127 = vmatpush1.msra.mxu0 %v1089
    %1128 = vmatprep.subr.mxu0 0.0
    %1129 = vmatpush1.msra.mxu0 %v1088
    %1130 = vmatprep.subr.mxu0 0.0
    %1131 = vmatpush2.msra.mxu0 0.0
    %1132 = vmatprep.subr.mxu0 0.0
    %1133 = vmatpush2.msra.mxu0 0.0
    %1134 = vmatprep.subr.mxu0 0.0
    %1135 = vmatpush2.msra.mxu0 0.0
    %1136 = vmatprep.subr.mxu0 0.0
    %1137 = vmatpush2.msra.mxu0 0.0
    %1138 = vmatprep.subr.mxu0 0.0
    %1139 = vmatpush2.msra.mxu0 0.0
    %1140 = vmatprep.subr.mxu0 0.0
    %1141 = vmatpush2.msra.mxu0 0.0
    %1142 = vmatprep.subr.mxu0 0.0
    %1143 = vmatpush2.msra.mxu0 0.0
    %1144 = vmatprep.subr.mxu0 0.0
    %1145 = vmatpush2.msra.mxu0 0.0
    %1146 = vmatprep.subr.mxu0 0.0
    %1147 = vmatpush2.msra.mxu0 0.0
    %1148 = vmatprep.subr.mxu0 0.0
    %1149 = vmatpush2.msra.mxu0 0.0
    %1150 = vmatprep.subr.mxu0 0.0
    %1151 = vmatpush2.msra.mxu0 0.0
    %1152 = vmatprep.subr.mxu0 0.0
    %1153 = vmatpush2.msra.mxu0 0.0
    %1154 = vmatprep.subr.mxu0 0.0
    %1155 = vmatpush2.msra.mxu0 0.0
    %1156 = vmatprep.subr.mxu0 0.0
    %1157 = vmatpush2.msra.mxu0 0.0
    %1158 = vmatprep.subr.mxu0 0.0
    %1159 = vmatpush2.msra.mxu0 0.0
    %1160 = vmatprep.subr.mxu0 0.0
    %1161 = vmatpush2.msra.mxu0 0.0
    %1162 = vmatprep.mubr.f32.mxu0 0.0
    %1163 = vmatmul.mubr.f32.gmra.mxu0 %v1093
    %v1164 = vpop.f32.mrf.mxu0
    %v1165 = vadd.f32 0.0, %v1164
    %v1166 = vpop.f32.mrf.mxu0
    %1167 = vmatprep.mubr.f32.mxu0 0.0
    %1168 = vmatmul.mubr.f32.gmra.mxu0 %v1096
    %v1169 = vpop.f32.mrf.mxu0
    %v1170 = vadd.f32 0.0, %v1169
    %v1171 = vpop.f32.mrf.mxu0
    %1172 = vdwg.mxu0
    %1173 = vst.msk [vmem:[#allocation11] sm:$0xff] %vm81, %v1165
    %1174 = vst.msk [vmem:[#allocation11 + $0x8] sm:$0xff] %vm81, %v1170
    // Predicated region
    $region34: #{llama_attention_pallas.1} parent=1 // pred_check
      _
    $region35: #{llama_attention_pallas.1} parent=1 // pred_check_branch
      %1176 = sbr.rel (0) target = $region37
    $region36: #{llama_attention_pallas.1} parent=1 // pred_region
      %s1178 = ssub.s32 256, 256
      %1179 = vsyncadd [#allocation5], %s1178
      %s1180 = sshll.u32 [#allocation11], 4
      %s1181 = int_to_ptr.vmem [resolvable:$true] %s1180
      %1186 = dma.vmem_to_hbm [thread:$0]  %s1181, 256, %s4, [#allocation5], 128, 128, 8
    $region37: #{llama_attention_pallas.1} parent=1 // pred_fallthru
      _
    // Predicated region
    $region38: #{llama_attention_pallas.1} parent=1 // pred_check
      _
    $region39: #{llama_attention_pallas.1} parent=1 // pred_check_branch
      %1188 = sbr.rel (0) target = $region41
    $region40: #{llama_attention_pallas.1} parent=1 // pred_region
      _
    $region41: #{llama_attention_pallas.1} parent=1 // pred_fallthru
      _
    // Predicated region
    $region42: #{llama_attention_pallas.1} parent=1 // pred_check
      _
    $region43: #{llama_attention_pallas.1} parent=1 // pred_check_branch
      %1190 = sbr.rel (0) target = $region45
    $region44: #{llama_attention_pallas.1} parent=1 // pred_region
      %1191 = dma.done [#allocation5], 256
    $region45: #{llama_attention_pallas.1} parent=1 // pred_fallthru
      _
    // Predicated region
    $region46: #{llama_attention_pallas.1} parent=1 // pred_check
      _
    $region47: #{llama_attention_pallas.1} parent=1 // pred_check_branch
      %1193 = sbr.rel (0) target = $region49
    $region48: #{llama_attention_pallas.1} parent=1 // pred_region
      _
    $region49: #{llama_attention_pallas.1} parent=1 // pred_fallthru
      _
    %1194 = vsyncpa [#allocation4], 1
    %1195 = vsyncpa [#allocation7], 1
    %1196 = vsyncpa [#allocation10], 1
    %1197 = vsyncpa [#allocation5], 1

</llo_original>
